<compile_context>
chip_gen: v5e
topology: v5e:2x2
jax: 0.10.0
libtpu: 0.0.40
codegen_flags: <defaults>
</compile_context>

<pallas_src>
import functools

import jax
import jax.numpy as jnp
from jax.experimental import pallas as pl
from jax.experimental.pallas import tpu as pltpu


def _cdiv(a, b):
    return (a + b - 1) // b


def _conv_taps_kernel(s_ref, w_ref, b_ref, o_ref, *, kh_kw, w_pad, p_rows,
                      neg_slope):
    """One grid step = tile_h output rows (all W_pad flattened cols) of one image.

    s_ref : (1, slab_len, Cin)   flattened padded-input slab (incl. halo rows)
    w_ref : (KH*KW, Cin, Cout)   per-tap conv weights
    b_ref : (1, Cout)            bias (f32)
    o_ref : (1, P, Cout)         P = tile_h * W_pad flattened output positions
    """
    slab = s_ref[0]                                    # (slab_len, Cin)
    cout = o_ref.shape[-1]
    acc = jnp.zeros((p_rows, cout), jnp.float32)
    # KH*KW shallow MXU dots; each tap's window is a contiguous static
    # sublane slice of the flattened slab (offset kh*W_pad + kw).  The last
    # KW-1 columns of each output row read wrapped data -> garbage that the
    # wrapper slices away.
    for t, (kh, kw) in enumerate(kh_kw):
        off = kh * w_pad + kw
        x_t = slab[off:off + p_rows, :]                # (P, Cin)
        acc = acc + jnp.dot(x_t, w_ref[t],
                            preferred_element_type=jnp.float32)
    acc = acc + b_ref[...].astype(jnp.float32)
    out = jnp.maximum(acc, neg_slope * acc)            # leaky_relu, 0<slope<1
    o_ref[0] = out.astype(o_ref.dtype)


def conv_bn_leaky_relu2d(x_nchw, weight, bias, *, padding=1, neg_slope=0.2,
                         target_rows=1024, compute_dtype=None):
    """Forward of ConvBnLeakyRelu2d (stride=1, dilation=1, groups=1).

    x_nchw : (N, Cin, H, W)       PyTorch layout
    weight : (Cout, Cin, KH, KW)  PyTorch Conv2d weight layout
    bias   : (Cout,)
    returns: (N, Cout, H_out, W_out) in NCHW, matching PyTorch.
    """
    N, Cin, H, W = x_nchw.shape
    Cout, Cin_w, KH, KW = weight.shape
    assert Cin_w == Cin

    H_pad, W_pad = H + 2 * padding, W + 2 * padding
    H_out, W_out = H_pad - KH + 1, W_pad - KW + 1

    # ---- choose the per-step row tile (P = tile_h*W_pad flattened rows) ----
    tile_h = max(1, min(H_out, target_rows // max(1, W_pad)))
    if N * _cdiv(H_out, tile_h) < 2 and H_out >= 2:
        tile_h = _cdiv(H_out, 2)        # keep >= 2 parallel steps (v7x: 2 TCs)
    num_h = _cdiv(H_out, tile_h)
    P = tile_h * W_pad
    slab_len = (tile_h + KH - 1) * W_pad + (KW - 1)

    # ---- wrapper-side layout prep (single fused XLA pass; no 9x im2col) ----
    x_nhwc = jnp.transpose(x_nchw, (0, 2, 3, 1))
    x_p = jnp.pad(x_nhwc,
                  ((0, 0), (padding, padding), (padding, padding), (0, 0)))
    x_flat = x_p.reshape(N, H_pad * W_pad, Cin)
    need = (num_h - 1) * P + slab_len
    x_flat = jnp.pad(x_flat, ((0, 0), (0, max(0, need - H_pad * W_pad)), (0, 0)))
    if num_h == 1:
        slabs = x_flat                                # (N, slab_len, Cin), no dup
    else:
        # small halo duplication: (tile_h+KH-1)/tile_h ~ a few % extra bytes
        slabs = jnp.stack(
            [x_flat[:, t * P:t * P + slab_len, :] for t in range(num_h)],
            axis=1).reshape(N * num_h, slab_len, Cin)

    # Weights (Cout, Cin, KH, KW) -> per-tap (KH*KW, Cin, Cout); bias -> (1, Cout)
    w_taps = jnp.transpose(weight, (2, 3, 1, 0)).reshape(KH * KW, Cin, Cout)
    b2 = bias.reshape(1, Cout).astype(jnp.float32)

    if compute_dtype is not None:                     # e.g. jnp.bfloat16 on v6e/v7x
        slabs = slabs.astype(compute_dtype)
        w_taps = w_taps.astype(compute_dtype)

    kh_kw = tuple((kh, kw) for kh in range(KH) for kw in range(KW))
    kernel = functools.partial(_conv_taps_kernel, kh_kw=kh_kw, w_pad=W_pad,
                               p_rows=P, neg_slope=neg_slope)

    out3 = pl.pallas_call(
        kernel,
        out_shape=jax.ShapeDtypeStruct((N * num_h, P, Cout), x_nchw.dtype),
        grid_spec=pltpu.PrefetchScalarGridSpec(
            num_scalar_prefetch=0,
            grid=(N * num_h,),
            in_specs=[
                pl.BlockSpec((1, slab_len, Cin), lambda i: (i, 0, 0)),
                pl.BlockSpec((KH * KW, Cin, Cout), lambda i: (0, 0, 0)),
                pl.BlockSpec((1, Cout), lambda i: (0, 0)),
            ],
            out_specs=pl.BlockSpec((1, P, Cout), lambda i: (i, 0, 0)),
        ),
        compiler_params=pltpu.CompilerParams(
            dimension_semantics=("parallel",),
            # well under v7x's 64 MiB physical VMEM even with large tiles
            vmem_limit_bytes=48 * 1024 * 1024,
        ),
    )(slabs, w_taps, b2)

    # Drop the KW-1 garbage columns / overflow rows, restore PyTorch NCHW.
    out = out3.reshape(N, num_h * tile_h, W_pad, Cout)[:, :H_out, :W_out, :]
    return jnp.transpose(out, (0, 3, 1, 2))


if __name__ == "__main__":
    # Small deterministic example consistent with the module's forward.
    N, Cin, Cout, H, W = 2, 4, 8, 16, 16
    KH = KW = 3

    key = jax.random.PRNGKey(0)
    kx, kwt, kb = jax.random.split(key, 3)
    x = jax.random.normal(kx, (N, Cin, H, W), dtype=jnp.float32)
    # Deterministic synthetic parameters (not a checkpoint load).
    weight = jax.random.normal(kwt, (Cout, Cin, KH, KW), dtype=jnp.float32) * 0.1
    bias = jax.random.normal(kb, (Cout,), dtype=jnp.float32) * 0.1

    fwd = jax.jit(functools.partial(conv_bn_leaky_relu2d,
                                    padding=1, neg_slope=0.2))
    out = fwd(x, weight, bias)
    out = jax.block_until_ready(out)

    # Reference: same semantics as F.conv2d(padding=1) + leaky_relu(0.2).
    ref = jax.lax.conv_general_dilated(
        x, weight, window_strides=(1, 1), padding=((1, 1), (1, 1)),
        dimension_numbers=("NCHW", "OIHW", "NCHW"),
    ) + bias.reshape(1, Cout, 1, 1)
    ref = jnp.where(ref > 0, ref, 0.2 * ref)

    assert out.shape == (N, Cout, H, W)
    assert jnp.allclose(out, ref, atol=1e-4, rtol=1e-4)

    print("KERNEL_OK")
</pallas_src>

<mosaic_0001>
module attributes {stable_mosaic.version = 11 : i64} {
  func.func @_conv_taps_kernel(%arg0: i32, %arg1: memref<1x326x4xf32, #tpu.memory_space<vmem>>, %arg2: memref<9x4x8xf32, #tpu.memory_space<vmem>>, %arg3: memref<1x8xf32, #tpu.memory_space<vmem>>, %arg4: memref<1x288x8xf32, #tpu.memory_space<vmem>>) attributes {dimension_semantics = [#tpu.dimension_semantics<parallel>], iteration_bounds = array<i64: 2>, scalar_prefetch = 0 : i64, scratch_operands = 0 : i64, tpu.core_type = #tpu.core_type<tc>, window_params = [{transform_indices = @transform_0, window_bounds = array<i64: 1, 326, 4>}, {pipeline_mode = #tpu.pipeline_mode<synchronous>, transform_indices = @transform_1, window_bounds = array<i64: 9, 4, 8>}, {pipeline_mode = #tpu.pipeline_mode<synchronous>, transform_indices = @transform_2, window_bounds = array<i64: 1, 8>}, {transform_indices = @transform_3, window_bounds = array<i64: 1, 288, 8>}]} {
    %c0 = arith.constant 0 : index
    %c0_0 = arith.constant 0 : index
    %c0_1 = arith.constant 0 : index
    %0 = vector.load %arg1[%c0, %c0_0, %c0_1] : memref<1x326x4xf32, #tpu.memory_space<vmem>>, vector<1x326x4xf32>
    %1 = vector.shape_cast %0 : vector<1x326x4xf32> to vector<326x4xf32>
    %cst = arith.constant 0.000000e+00 : f32
    %2 = vector.broadcast %cst : f32 to vector<288x8xf32>
    %3 = vector.extract_strided_slice %1 {offsets = [0, 0], sizes = [288, 4], strides = [1, 1]} : vector<326x4xf32> to vector<288x4xf32>
    %c0_2 = arith.constant 0 : index
    %c0_3 = arith.constant 0 : index
    %c0_4 = arith.constant 0 : index
    %4 = vector.load %arg2[%c0_2, %c0_3, %c0_4] : memref<9x4x8xf32, #tpu.memory_space<vmem>>, vector<1x4x8xf32>
    %5 = vector.shape_cast %4 : vector<1x4x8xf32> to vector<4x8xf32>
    %cst_5 = arith.constant dense<0.000000e+00> : vector<288x8xf32>
    %6 = tpu.matmul %3, %5, %cst_5 {dimension_numbers = #tpu.dot_dimension_numbers<[1], [0], [0], [1], [0, 0, 1, 1], [], []>} : vector<288x4xf32>, vector<4x8xf32>, vector<288x8xf32> -> vector<288x8xf32>
    %7 = arith.addf %2, %6 : vector<288x8xf32>
    %8 = vector.extract_strided_slice %1 {offsets = [1, 0], sizes = [288, 4], strides = [1, 1]} : vector<326x4xf32> to vector<288x4xf32>
    %c1 = arith.constant 1 : index
    %c0_6 = arith.constant 0 : index
    %c0_7 = arith.constant 0 : index
    %9 = vector.load %arg2[%c1, %c0_6, %c0_7] : memref<9x4x8xf32, #tpu.memory_space<vmem>>, vector<1x4x8xf32>
    %10 = vector.shape_cast %9 : vector<1x4x8xf32> to vector<4x8xf32>
    %cst_8 = arith.constant dense<0.000000e+00> : vector<288x8xf32>
    %11 = tpu.matmul %8, %10, %cst_8 {dimension_numbers = #tpu.dot_dimension_numbers<[1], [0], [0], [1], [0, 0, 1, 1], [], []>} : vector<288x4xf32>, vector<4x8xf32>, vector<288x8xf32> -> vector<288x8xf32>
    %12 = arith.addf %7, %11 : vector<288x8xf32>
    %13 = vector.extract_strided_slice %1 {offsets = [2, 0], sizes = [288, 4], strides = [1, 1]} : vector<326x4xf32> to vector<288x4xf32>
    %c2 = arith.constant 2 : index
    %c0_9 = arith.constant 0 : index
    %c0_10 = arith.constant 0 : index
    %14 = vector.load %arg2[%c2, %c0_9, %c0_10] : memref<9x4x8xf32, #tpu.memory_space<vmem>>, vector<1x4x8xf32>
    %15 = vector.shape_cast %14 : vector<1x4x8xf32> to vector<4x8xf32>
    %cst_11 = arith.constant dense<0.000000e+00> : vector<288x8xf32>
    %16 = tpu.matmul %13, %15, %cst_11 {dimension_numbers = #tpu.dot_dimension_numbers<[1], [0], [0], [1], [0, 0, 1, 1], [], []>} : vector<288x4xf32>, vector<4x8xf32>, vector<288x8xf32> -> vector<288x8xf32>
    %17 = arith.addf %12, %16 : vector<288x8xf32>
    %18 = vector.extract_strided_slice %1 {offsets = [18, 0], sizes = [288, 4], strides = [1, 1]} : vector<326x4xf32> to vector<288x4xf32>
    %c3 = arith.constant 3 : index
    %c0_12 = arith.constant 0 : index
    %c0_13 = arith.constant 0 : index
    %19 = vector.load %arg2[%c3, %c0_12, %c0_13] : memref<9x4x8xf32, #tpu.memory_space<vmem>>, vector<1x4x8xf32>
    %20 = vector.shape_cast %19 : vector<1x4x8xf32> to vector<4x8xf32>
    %cst_14 = arith.constant dense<0.000000e+00> : vector<288x8xf32>
    %21 = tpu.matmul %18, %20, %cst_14 {dimension_numbers = #tpu.dot_dimension_numbers<[1], [0], [0], [1], [0, 0, 1, 1], [], []>} : vector<288x4xf32>, vector<4x8xf32>, vector<288x8xf32> -> vector<288x8xf32>
    %22 = arith.addf %17, %21 : vector<288x8xf32>
    %23 = vector.extract_strided_slice %1 {offsets = [19, 0], sizes = [288, 4], strides = [1, 1]} : vector<326x4xf32> to vector<288x4xf32>
    %c4 = arith.constant 4 : index
    %c0_15 = arith.constant 0 : index
    %c0_16 = arith.constant 0 : index
    %24 = vector.load %arg2[%c4, %c0_15, %c0_16] : memref<9x4x8xf32, #tpu.memory_space<vmem>>, vector<1x4x8xf32>
    %25 = vector.shape_cast %24 : vector<1x4x8xf32> to vector<4x8xf32>
    %cst_17 = arith.constant dense<0.000000e+00> : vector<288x8xf32>
    %26 = tpu.matmul %23, %25, %cst_17 {dimension_numbers = #tpu.dot_dimension_numbers<[1], [0], [0], [1], [0, 0, 1, 1], [], []>} : vector<288x4xf32>, vector<4x8xf32>, vector<288x8xf32> -> vector<288x8xf32>
    %27 = arith.addf %22, %26 : vector<288x8xf32>
    %28 = vector.extract_strided_slice %1 {offsets = [20, 0], sizes = [288, 4], strides = [1, 1]} : vector<326x4xf32> to vector<288x4xf32>
    %c5 = arith.constant 5 : index
    %c0_18 = arith.constant 0 : index
    %c0_19 = arith.constant 0 : index
    %29 = vector.load %arg2[%c5, %c0_18, %c0_19] : memref<9x4x8xf32, #tpu.memory_space<vmem>>, vector<1x4x8xf32>
    %30 = vector.shape_cast %29 : vector<1x4x8xf32> to vector<4x8xf32>
    %cst_20 = arith.constant dense<0.000000e+00> : vector<288x8xf32>
    %31 = tpu.matmul %28, %30, %cst_20 {dimension_numbers = #tpu.dot_dimension_numbers<[1], [0], [0], [1], [0, 0, 1, 1], [], []>} : vector<288x4xf32>, vector<4x8xf32>, vector<288x8xf32> -> vector<288x8xf32>
    %32 = arith.addf %27, %31 : vector<288x8xf32>
    %33 = vector.extract_strided_slice %1 {offsets = [36, 0], sizes = [288, 4], strides = [1, 1]} : vector<326x4xf32> to vector<288x4xf32>
    %c6 = arith.constant 6 : index
    %c0_21 = arith.constant 0 : index
    %c0_22 = arith.constant 0 : index
    %34 = vector.load %arg2[%c6, %c0_21, %c0_22] : memref<9x4x8xf32, #tpu.memory_space<vmem>>, vector<1x4x8xf32>
    %35 = vector.shape_cast %34 : vector<1x4x8xf32> to vector<4x8xf32>
    %cst_23 = arith.constant dense<0.000000e+00> : vector<288x8xf32>
    %36 = tpu.matmul %33, %35, %cst_23 {dimension_numbers = #tpu.dot_dimension_numbers<[1], [0], [0], [1], [0, 0, 1, 1], [], []>} : vector<288x4xf32>, vector<4x8xf32>, vector<288x8xf32> -> vector<288x8xf32>
    %37 = arith.addf %32, %36 : vector<288x8xf32>
    %38 = vector.extract_strided_slice %1 {offsets = [37, 0], sizes = [288, 4], strides = [1, 1]} : vector<326x4xf32> to vector<288x4xf32>
    %c7 = arith.constant 7 : index
    %c0_24 = arith.constant 0 : index
    %c0_25 = arith.constant 0 : index
    %39 = vector.load %arg2[%c7, %c0_24, %c0_25] : memref<9x4x8xf32, #tpu.memory_space<vmem>>, vector<1x4x8xf32>
    %40 = vector.shape_cast %39 : vector<1x4x8xf32> to vector<4x8xf32>
    %cst_26 = arith.constant dense<0.000000e+00> : vector<288x8xf32>
    %41 = tpu.matmul %38, %40, %cst_26 {dimension_numbers = #tpu.dot_dimension_numbers<[1], [0], [0], [1], [0, 0, 1, 1], [], []>} : vector<288x4xf32>, vector<4x8xf32>, vector<288x8xf32> -> vector<288x8xf32>
    %42 = arith.addf %37, %41 : vector<288x8xf32>
    %43 = vector.extract_strided_slice %1 {offsets = [38, 0], sizes = [288, 4], strides = [1, 1]} : vector<326x4xf32> to vector<288x4xf32>
    %c8 = arith.constant 8 : index
    %c0_27 = arith.constant 0 : index
    %c0_28 = arith.constant 0 : index
    %44 = vector.load %arg2[%c8, %c0_27, %c0_28] : memref<9x4x8xf32, #tpu.memory_space<vmem>>, vector<1x4x8xf32>
    %45 = vector.shape_cast %44 : vector<1x4x8xf32> to vector<4x8xf32>
    %cst_29 = arith.constant dense<0.000000e+00> : vector<288x8xf32>
    %46 = tpu.matmul %43, %45, %cst_29 {dimension_numbers = #tpu.dot_dimension_numbers<[1], [0], [0], [1], [0, 0, 1, 1], [], []>} : vector<288x4xf32>, vector<4x8xf32>, vector<288x8xf32> -> vector<288x8xf32>
    %47 = arith.addf %42, %46 : vector<288x8xf32>
    %c0_30 = arith.constant 0 : index
    %c0_31 = arith.constant 0 : index
    %48 = vector.load %arg3[%c0_30, %c0_31] : memref<1x8xf32, #tpu.memory_space<vmem>>, vector<1x8xf32>
    %49 = vector.broadcast %48 : vector<1x8xf32> to vector<288x8xf32>
    %50 = arith.addf %47, %49 : vector<288x8xf32>
    %cst_32 = arith.constant 2.000000e-01 : f32
    %51 = vector.broadcast %cst_32 : f32 to vector<288x8xf32>
    %52 = arith.mulf %51, %50 : vector<288x8xf32>
    %53 = arith.maximumf %50, %52 : vector<288x8xf32>
    %c0_33 = arith.constant 0 : index
    %c0_34 = arith.constant 0 : index
    %c0_35 = arith.constant 0 : index
    %54 = vector.load %arg4[%c0_33, %c0_34, %c0_35] : memref<1x288x8xf32, #tpu.memory_space<vmem>>, vector<1x288x8xf32>
    %55 = vector.shape_cast %54 : vector<1x288x8xf32> to vector<288x8xf32>
    %56 = vector.shape_cast %53 : vector<288x8xf32> to vector<1x288x8xf32>
    tpu.vector_store %arg4[%c0_33, %c0_34, %c0_35], %56 {strides = array<i32>} : memref<1x288x8xf32, #tpu.memory_space<vmem>>, vector<1x288x8xf32>,
    return
  }
  func.func @transform_0(%arg0: i32) -> (i32, i32, i32) {
    %c0_i32 = arith.constant 0 : i32
    %c0_i32_0 = arith.constant 0 : i32
    %c0_i32_1 = arith.constant 0 : i32
    return %arg0, %c0_i32, %c0_i32_0 : i32, i32, i32
  }
  func.func @transform_1(%arg0: i32) -> (i32, i32, i32) {
    %c0_i32 = arith.constant 0 : i32
    %c0_i32_0 = arith.constant 0 : i32
    %c0_i32_1 = arith.constant 0 : i32
    %c0_i32_2 = arith.constant 0 : i32
    return %c0_i32, %c0_i32_0, %c0_i32_1 : i32, i32, i32
  }
  func.func @transform_2(%arg0: i32) -> (i32, i32) {
    %c0_i32 = arith.constant 0 : i32
    %c0_i32_0 = arith.constant 0 : i32
    %c0_i32_1 = arith.constant 0 : i32
    return %c0_i32, %c0_i32_0 : i32, i32
  }
  func.func @transform_3(%arg0: i32) -> (i32, i32, i32) {
    %c0_i32 = arith.constant 0 : i32
    %c0_i32_0 = arith.constant 0 : i32
    %c0_i32_1 = arith.constant 0 : i32
    return %arg0, %c0_i32, %c0_i32_0 : i32, i32, i32
  }
}

</mosaic_0001>

<llo_original>
// kernel: conv_bn_leaky_relu2d.1
$region0: #{conv_bn_leaky_relu2d.1}
  #allocation0 [shape = 'u32[]', space=smem, size = 0x4, offset = 0x4, fixed_abs, tag = 'smem constant byte address 0x4 - core index']
  #allocation1 [shape = 'u32[72,128]{1,0:T(1,128)}', space=vmem, size = 0x9000, scoped, tag = 'internal scratch']
  %s0 = inlined_call_operand.vmem [shape: f32[2,326,4], index: 0, kind: input, shape index: {}]
  %s1 = inlined_call_operand.vmem [shape: f32[9,4,8], index: 1, kind: input, shape index: {}]
  %s2 = inlined_call_operand.vmem [shape: f32[1,8], index: 2, kind: input, shape index: {}]
  %s3 = inlined_call_operand.vmem [shape: f32[2,288,8], index: 3, kind: output, shape index: {}]
  %s4 = sld [smem:[#allocation0]]
  $region45: #{conv_bn_leaky_relu2d.1} parent=0
    _
  %s6 = ssub.s32 1, %s4
  %s7 = scalar_select 0, %s6, %s4
  loop: start=0, step=1, limit=4
  $region2: #{conv_bn_leaky_relu2d.1} parent=0 // loop_pre_header
    _
  $region3: #{conv_bn_leaky_relu2d.1} parent=0 // loop_header
    %s9 = sphi 0, %s13
    %p10 = scmp.ge.s32.totalorder %s9, 4
    %s19 = sphi 0, %s21
    %s22 = sphi 0, %s19
    %s23 = sphi 0, %s22
    %s39 = sphi 0, %s23
    %s43 = sphi 0, %s43
    %s45 = sphi 0, %s43
    %s46 = sphi 0, %s45
    %s60 = sphi 0, %s46
    %s64 = sphi 0, %s64
    %s66 = sphi 0, %s64
    %s67 = sphi 0, %s66
    %s81 = sphi 0, %s67
    %s87 = sphi 0, %s89
    %s90 = sphi 0, %s87
    %s91 = sphi 0, %s90
    %s107 = sphi 0, %s91
  $region4: #{conv_bn_leaky_relu2d.1} parent=0 // loop_header_branch
    %12 = sbr.rel (%p10) target = $region8
  $region5: #{conv_bn_leaky_relu2d.1} parent=0 // loop_body
    %s14 = ssub.s32 %s9, 1
    %s15 = ssub.s32 %s9, 2
    %s16 = sadd.s32 %s9, 1
    %s17 = ssub.s32 %s9, %s16
    %p18 = scmp.eq.s32.totalorder %s17, 0
    %s20 = sadd.s32 %s19, 1
    %s21 = scalar_select %p18, %s19, %s20
    %p24 = pneg %p18
    %p25 = scmp.eq.s32.totalorder %s9, 1
    %p26 = por %p24, %p25
    %p27 = scmp.ne.s32.totalorder %s19, %s22
    %p28 = scmp.eq.s32.totalorder %s9, 0
    %p29 = por %p27, %p28
    %p30 = scmp.ne.s32.totalorder %s19, %s22
    %p31 = scmp.eq.s32.totalorder %s14, 1
    %p32 = por %p30, %p31
    %p33 = scmp.ne.s32.totalorder %s22, %s23
    %p34 = scmp.eq.s32.totalorder %s14, 0
    %p35 = por %p33, %p34
    %p36 = scmp.ne.s32.totalorder %s22, %s23
    %p37 = scmp.eq.s32.totalorder %s15, 1
    %p38 = por %p36, %p37
    %p40 = scmp.ne.s32.totalorder %s23, %s39
    %p41 = scmp.eq.s32.totalorder %s15, 0
    %p42 = por %p40, %p41
    %s44 = sadd.s32 %s43, 1
    %p47 = scmp.eq.s32.totalorder %s9, 1
    %p48 = scmp.ne.s32.totalorder %s43, %s45
    %p49 = scmp.eq.s32.totalorder %s9, 0
    %p50 = por %p48, %p49
    %p51 = scmp.ne.s32.totalorder %s43, %s45
    %p52 = scmp.eq.s32.totalorder %s14, 1
    %p53 = por %p51, %p52
    %p54 = scmp.ne.s32.totalorder %s45, %s46
    %p55 = scmp.eq.s32.totalorder %s14, 0
    %p56 = por %p54, %p55
    %p57 = scmp.ne.s32.totalorder %s45, %s46
    %p58 = scmp.eq.s32.totalorder %s15, 1
    %p59 = por %p57, %p58
    %p61 = scmp.ne.s32.totalorder %s46, %s60
    %p62 = scmp.eq.s32.totalorder %s15, 0
    %p63 = por %p61, %p62
    %s65 = sadd.s32 %s64, 1
    %p68 = scmp.eq.s32.totalorder %s9, 1
    %p69 = scmp.ne.s32.totalorder %s64, %s66
    %p70 = scmp.eq.s32.totalorder %s9, 0
    %p71 = por %p69, %p70
    %p72 = scmp.ne.s32.totalorder %s64, %s66
    %p73 = scmp.eq.s32.totalorder %s14, 1
    %p74 = por %p72, %p73
    %p75 = scmp.ne.s32.totalorder %s66, %s67
    %p76 = scmp.eq.s32.totalorder %s14, 0
    %p77 = por %p75, %p76
    %p78 = scmp.ne.s32.totalorder %s66, %s67
    %p79 = scmp.eq.s32.totalorder %s15, 1
    %p80 = por %p78, %p79
    %p82 = scmp.ne.s32.totalorder %s67, %s81
    %p83 = scmp.eq.s32.totalorder %s15, 0
    %p84 = por %p82, %p83
    %s85 = ssub.s32 %s9, %s16
    %p86 = scmp.eq.s32.totalorder %s85, 0
    %s88 = sadd.s32 %s87, 1
    %s89 = scalar_select %p86, %s87, %s88
    %p92 = pneg %p86
    %p93 = scmp.eq.s32.totalorder %s9, 1
    %p94 = por %p92, %p93
    %p95 = scmp.ne.s32.totalorder %s87, %s90
    %p96 = scmp.eq.s32.totalorder %s9, 0
    %p97 = por %p95, %p96
    %p98 = scmp.ne.s32.totalorder %s87, %s90
    %p99 = scmp.eq.s32.totalorder %s14, 1
    %p100 = por %p98, %p99
    %p101 = scmp.ne.s32.totalorder %s90, %s91
    %p102 = scmp.eq.s32.totalorder %s14, 0
    %p103 = por %p101, %p102
    %p104 = scmp.ne.s32.totalorder %s90, %s91
    %p105 = scmp.eq.s32.totalorder %s15, 1
    %p106 = por %p104, %p105
    %p108 = scmp.ne.s32.totalorder %s91, %s107
    %p109 = scmp.eq.s32.totalorder %s15, 0
    %p110 = por %p108, %p109
    %p111 = scmp.le.s32.totalorder 1, %s9
    %p112 = scmp.lt.s32.totalorder %s9, 3
    %p113 = pnand %p111, %p112
    %p114 = pneg %p113
    // Predicated region
    $region9: #{conv_bn_leaky_relu2d.1} parent=5 // pred_check
      _
    $region10: #{conv_bn_leaky_relu2d.1} parent=5 // pred_check_branch
      %116 = sbr.rel (%p113) target = $region12
    $region11: #{conv_bn_leaky_relu2d.1} parent=5 // pred_region
      %s117 = ssub.s32 %s9, 1
      // Predicated region
      $region13: #{conv_bn_leaky_relu2d.1} parent=11 // pred_check
        %p118 = pneg %p56
      $region14: #{conv_bn_leaky_relu2d.1} parent=11 // pred_check_branch
        %120 = sbr.rel (%p118) target = $region16
      $region15: #{conv_bn_leaky_relu2d.1} parent=11 // pred_region
        _
      $region16: #{conv_bn_leaky_relu2d.1} parent=11 // pred_fallthru
        _
      // Predicated region
      $region17: #{conv_bn_leaky_relu2d.1} parent=11 // pred_check
        %p121 = pneg %p77
      $region18: #{conv_bn_leaky_relu2d.1} parent=11 // pred_check_branch
        %123 = sbr.rel (%p121) target = $region20
      $region19: #{conv_bn_leaky_relu2d.1} parent=11 // pred_region
        _
      $region20: #{conv_bn_leaky_relu2d.1} parent=11 // pred_fallthru
        _
    $region12: #{conv_bn_leaky_relu2d.1} parent=5 // pred_fallthru
      _
    %p124 = scmp.lt.s32.totalorder %s9, 2
    // Predicated region
    $region21: #{conv_bn_leaky_relu2d.1} parent=5 // pred_check
      %p125 = pneg %p124
    $region22: #{conv_bn_leaky_relu2d.1} parent=5 // pred_check_branch
      %127 = sbr.rel (%p125) target = $region24
    $region23: #{conv_bn_leaky_relu2d.1} parent=5 // pred_region
      // Predicated region
      $region25: #{conv_bn_leaky_relu2d.1} parent=23 // pred_check
        %p128 = pneg %p29
      $region26: #{conv_bn_leaky_relu2d.1} parent=23 // pred_check_branch
        %130 = sbr.rel (%p128) target = $region28
      $region27: #{conv_bn_leaky_relu2d.1} parent=23 // pred_region
        %p131 = scmp.lt.s32.totalorder %s9, 1
        %s132 = scalar_select %p131, %s9, 1
        %s133 = smul.addr %s132, 41
        %s134 = smul.addr %s133, 8
        %s135 = scalar_lea.vmem %s0, %s134
      $region28: #{conv_bn_leaky_relu2d.1} parent=23 // pred_fallthru
        _
    $region24: #{conv_bn_leaky_relu2d.1} parent=5 // pred_fallthru
      _
    %p136 = scmp.le.s32.totalorder 1, %s9
    %p137 = scmp.lt.s32.totalorder %s9, 3
    %p138 = pnand %p136, %p137
    %p139 = pneg %p138
    // Predicated region
    $region29: #{conv_bn_leaky_relu2d.1} parent=5 // pred_check
      _
    $region30: #{conv_bn_leaky_relu2d.1} parent=5 // pred_check_branch
      %141 = sbr.rel (%p138) target = $region32
    $region31: #{conv_bn_leaky_relu2d.1} parent=5 // pred_region
      %s142 = ssub.s32 %s9, 1
      %p143 = scmp.lt.s32.totalorder %s14, 1
      %s144 = scalar_select %p143, %s14, 1
      %s145 = smul.addr %s144, 41
      %s146 = smul.addr %s145, 8
      %s147 = scalar_lea.vmem %s0, %s146
      %p148 = pneg %p35
      %p149 = pneg %p32
      %p150 = pneg %p56
      %p151 = pneg %p53
      %p152 = pneg %p77
      %p153 = pneg %p74
      %p154 = pneg %p103
      %p155 = pneg %p100
      %p156 = scmp.lt.s32.totalorder %s14, 1
      %s157 = scalar_select %p156, %s14, 1
      %s158 = smul.addr %s157, 36
      %s159 = smul.addr %s158, 8
      %s160 = scalar_lea.vmem %s3, %s159
      %p161 = scmp.lt.s32.totalorder %s14, 1
      %s162 = scalar_select %p161, %s14, 1
      %s163 = smul.addr %s162, 41
      %s164 = smul.addr %s163, 8
      %s165 = scalar_lea.vmem %s0, %s164
      %p166 = scmp.lt.s32.totalorder %s14, 1
      %s167 = scalar_select %p166, %s14, 1
      %s168 = smul.addr %s167, 36
      %s169 = smul.addr %s168, 8
      %s170 = scalar_lea.vmem %s3, %s169
      %v171 = vld [vmem:[%s165] sm:$0xff]
      %v172 = vld [vmem:[%s165 + $0x8] sm:$0xff]
      %v173 = vld [vmem:[%s165 + $0x10] sm:$0xff]
      %v174 = vld [vmem:[%s165 + $0x18] sm:$0xff]
      %v175 = vld [vmem:[%s165 + $0x20] sm:$0xff]
      %v176 = vld [vmem:[%s165 + $0x28] sm:$0xff]
      %v177 = vld [vmem:[%s165 + $0x30] sm:$0xff]
      %v178 = vld [vmem:[%s165 + $0x38] sm:$0xff]
      %v179 = vld [vmem:[%s165 + $0x40] sm:$0xff]
      %v180 = vld [vmem:[%s165 + $0x48] sm:$0xff]
      %v181 = vld [vmem:[%s165 + $0x50] sm:$0xff]
      %v182 = vld [vmem:[%s165 + $0x58] sm:$0xff]
      %v183 = vld [vmem:[%s165 + $0x60] sm:$0xff]
      %v184 = vld [vmem:[%s165 + $0x68] sm:$0xff]
      %v185 = vld [vmem:[%s165 + $0x70] sm:$0xff]
      %v186 = vld [vmem:[%s165 + $0x78] sm:$0xff]
      %v187 = vld [vmem:[%s165 + $0x80] sm:$0xff]
      %v188 = vld [vmem:[%s165 + $0x88] sm:$0xff]
      %v189 = vld [vmem:[%s165 + $0x90] sm:$0xff]
      %v190 = vld [vmem:[%s165 + $0x98] sm:$0xff]
      %v191 = vld [vmem:[%s165 + $0xa0] sm:$0xff]
      %v192 = vld [vmem:[%s165 + $0xa8] sm:$0xff]
      %v193 = vld [vmem:[%s165 + $0xb0] sm:$0xff]
      %v194 = vld [vmem:[%s165 + $0xb8] sm:$0xff]
      %v195 = vld [vmem:[%s165 + $0xc0] sm:$0xff]
      %v196 = vld [vmem:[%s165 + $0xc8] sm:$0xff]
      %v197 = vld [vmem:[%s165 + $0xd0] sm:$0xff]
      %v198 = vld [vmem:[%s165 + $0xd8] sm:$0xff]
      %v199 = vld [vmem:[%s165 + $0xe0] sm:$0xff]
      %v200 = vld [vmem:[%s165 + $0xe8] sm:$0xff]
      %v201 = vld [vmem:[%s165 + $0xf0] sm:$0xff]
      %v202 = vld [vmem:[%s165 + $0xf8] sm:$0xff]
      %v203 = vld [vmem:[%s165 + $0x100] sm:$0xff]
      %v204 = vld [vmem:[%s165 + $0x108] sm:$0xff]
      %v205 = vld [vmem:[%s165 + $0x110] sm:$0xff]
      %v206 = vld [vmem:[%s165 + $0x118] sm:$0xff]
      %v207 = vld [vmem:[%s165 + $0x120] sm:$0xff]
      %v208 = vld [vmem:[%s165 + $0x128] sm:$0xff]
      %v209 = vld [vmem:[%s165 + $0x130] sm:$0xff]
      %v210 = vld [vmem:[%s165 + $0x138] sm:$0xff]
      %v211 = vld [vmem:[%s165 + $0x140] sm:$0x3f]
      %v212 = vld [vmem:[%s1] sm:$0xf]
      %s213 = scalar_lea.vmem %s1, 4
      %v214 = vld [vmem:[%s213] sm:$0xf]
      %vm252 = vcmask 1046528
      %v253 = vrot.slane %v171, 1
      %v254 = vrot.slane %v172, 1
      %v255 = vsel %vm252, %v253, %v254
      %v256 = vrot.slane %v173, 1
      %v257 = vsel %vm252, %v254, %v256
      %v258 = vrot.slane %v174, 1
      %v259 = vsel %vm252, %v256, %v258
      %v260 = vrot.slane %v175, 1
      %v261 = vsel %vm252, %v258, %v260
      %v262 = vrot.slane %v176, 1
      %v263 = vsel %vm252, %v260, %v262
      %v264 = vrot.slane %v177, 1
      %v265 = vsel %vm252, %v262, %v264
      %v266 = vrot.slane %v178, 1
      %v267 = vsel %vm252, %v264, %v266
      %v268 = vrot.slane %v179, 1
      %v269 = vsel %vm252, %v266, %v268
      %v270 = vrot.slane %v180, 1
      %v271 = vsel %vm252, %v268, %v270
      %v272 = vrot.slane %v181, 1
      %v273 = vsel %vm252, %v270, %v272
      %v274 = vrot.slane %v182, 1
      %v275 = vsel %vm252, %v272, %v274
      %v276 = vrot.slane %v183, 1
      %v277 = vsel %vm252, %v274, %v276
      %v278 = vrot.slane %v184, 1
      %v279 = vsel %vm252, %v276, %v278
      %v280 = vrot.slane %v185, 1
      %v281 = vsel %vm252, %v278, %v280
      %v282 = vrot.slane %v186, 1
      %v283 = vsel %vm252, %v280, %v282
      %v284 = vrot.slane %v187, 1
      %v285 = vsel %vm252, %v282, %v284
      %v286 = vrot.slane %v188, 1
      %v287 = vsel %vm252, %v284, %v286
      %v288 = vrot.slane %v189, 1
      %v289 = vsel %vm252, %v286, %v288
      %v290 = vrot.slane %v190, 1
      %v291 = vsel %vm252, %v288, %v290
      %v292 = vrot.slane %v191, 1
      %v293 = vsel %vm252, %v290, %v292
      %v294 = vrot.slane %v192, 1
      %v295 = vsel %vm252, %v292, %v294
      %v296 = vrot.slane %v193, 1
      %v297 = vsel %vm252, %v294, %v296
      %v298 = vrot.slane %v194, 1
      %v299 = vsel %vm252, %v296, %v298
      %v300 = vrot.slane %v195, 1
      %v301 = vsel %vm252, %v298, %v300
      %v302 = vrot.slane %v196, 1
      %v303 = vsel %vm252, %v300, %v302
      %v304 = vrot.slane %v197, 1
      %v305 = vsel %vm252, %v302, %v304
      %v306 = vrot.slane %v198, 1
      %v307 = vsel %vm252, %v304, %v306
      %v308 = vrot.slane %v199, 1
      %v309 = vsel %vm252, %v306, %v308
      %v310 = vrot.slane %v200, 1
      %v311 = vsel %vm252, %v308, %v310
      %v312 = vrot.slane %v201, 1
      %v313 = vsel %vm252, %v310, %v312
      %v314 = vrot.slane %v202, 1
      %v315 = vsel %vm252, %v312, %v314
      %v316 = vrot.slane %v203, 1
      %v317 = vsel %vm252, %v314, %v316
      %v318 = vrot.slane %v204, 1
      %v319 = vsel %vm252, %v316, %v318
      %v320 = vrot.slane %v205, 1
      %v321 = vsel %vm252, %v318, %v320
      %v322 = vrot.slane %v206, 1
      %v323 = vsel %vm252, %v320, %v322
      %v324 = vrot.slane %v207, 1
      %v325 = vsel %vm252, %v322, %v324
      %vm326 = vcmask 31744
      %v327 = vsel %vm326, %v255, 0
      %v329 = vsel %vm326, %v257, 0
      %v331 = vsel %vm326, %v259, 0
      %v333 = vsel %vm326, %v261, 0
      %v335 = vsel %vm326, %v263, 0
      %v337 = vsel %vm326, %v265, 0
      %v339 = vsel %vm326, %v267, 0
      %v341 = vsel %vm326, %v269, 0
      %v343 = vsel %vm326, %v271, 0
      %v345 = vsel %vm326, %v273, 0
      %v347 = vsel %vm326, %v275, 0
      %v349 = vsel %vm326, %v277, 0
      %v351 = vsel %vm326, %v279, 0
      %v353 = vsel %vm326, %v281, 0
      %v355 = vsel %vm326, %v283, 0
      %v357 = vsel %vm326, %v285, 0
      %v359 = vsel %vm326, %v287, 0
      %v361 = vsel %vm326, %v289, 0
      %v363 = vsel %vm326, %v291, 0
      %v365 = vsel %vm326, %v293, 0
      %v367 = vsel %vm326, %v295, 0
      %v369 = vsel %vm326, %v297, 0
      %v371 = vsel %vm326, %v299, 0
      %v373 = vsel %vm326, %v301, 0
      %v375 = vsel %vm326, %v303, 0
      %v377 = vsel %vm326, %v305, 0
      %v379 = vsel %vm326, %v307, 0
      %v381 = vsel %vm326, %v309, 0
      %v383 = vsel %vm326, %v311, 0
      %v385 = vsel %vm326, %v313, 0
      %v387 = vsel %vm326, %v315, 0
      %v389 = vsel %vm326, %v317, 0
      %v391 = vsel %vm326, %v319, 0
      %v393 = vsel %vm326, %v321, 0
      %v395 = vsel %vm326, %v323, 0
      %v397 = vsel %vm326, %v325, 0
      %vm399 = vcmask 1043456
      %v401 = vsel %vm399, %v214, 0
      %403 = vmatpush.msra.mxu0 0.0
      %404 = vmatpush.msra.mxu0 0.0
      %405 = vmatpush.msra.mxu0 0.0
      %406 = vmatpush.msra.mxu0 0.0
      %407 = vmatpush.msra.mxu0 0.0
      %408 = vmatpush.msra.mxu0 0.0
      %409 = vmatpush.msra.mxu0 0.0
      %410 = vmatpush.msra.mxu0 0.0
      %411 = vmatpush.msra.mxu0 0.0
      %412 = vmatpush.msra.mxu0 0.0
      %413 = vmatpush.msra.mxu0 0.0
      %414 = vmatpush.msra.mxu0 0.0
      %415 = vmatpush.msra.mxu0 0.0
      %416 = vmatpush.msra.mxu0 0.0
      %417 = vmatpush.msra.mxu0 0.0
      %418 = vmatpush.msra.mxu0 %v401
      %419 = vmatmul.f32.gmra.mxu0 %v327
      %v420 = vpop.f32.mrf.mxu0
      %v421 = vadd.f32 0.0, %v420
      %422 = vmatmul.f32.gmra.mxu0 %v329
      %v423 = vpop.f32.mrf.mxu0
      %v424 = vadd.f32 0.0, %v423
      %425 = vmatmul.f32.gmra.mxu0 %v331
      %v426 = vpop.f32.mrf.mxu0
      %v427 = vadd.f32 0.0, %v426
      %428 = vmatmul.f32.gmra.mxu0 %v333
      %v429 = vpop.f32.mrf.mxu0
      %v430 = vadd.f32 0.0, %v429
      %431 = vmatmul.f32.gmra.mxu0 %v335
      %v432 = vpop.f32.mrf.mxu0
      %v433 = vadd.f32 0.0, %v432
      %434 = vmatmul.f32.gmra.mxu0 %v337
      %v435 = vpop.f32.mrf.mxu0
      %v436 = vadd.f32 0.0, %v435
      %437 = vmatmul.f32.gmra.mxu0 %v339
      %v438 = vpop.f32.mrf.mxu0
      %v439 = vadd.f32 0.0, %v438
      %440 = vmatmul.f32.gmra.mxu0 %v341
      %v441 = vpop.f32.mrf.mxu0
      %v442 = vadd.f32 0.0, %v441
      %443 = vmatmul.f32.gmra.mxu0 %v343
      %v444 = vpop.f32.mrf.mxu0
      %v445 = vadd.f32 0.0, %v444
      %446 = vmatmul.f32.gmra.mxu0 %v345
      %v447 = vpop.f32.mrf.mxu0
      %v448 = vadd.f32 0.0, %v447
      %449 = vmatmul.f32.gmra.mxu0 %v347
      %v450 = vpop.f32.mrf.mxu0
      %v451 = vadd.f32 0.0, %v450
      %452 = vmatmul.f32.gmra.mxu0 %v349
      %v453 = vpop.f32.mrf.mxu0
      %v454 = vadd.f32 0.0, %v453
      %455 = vmatmul.f32.gmra.mxu0 %v351
      %v456 = vpop.f32.mrf.mxu0
      %v457 = vadd.f32 0.0, %v456
      %458 = vmatmul.f32.gmra.mxu0 %v353
      %v459 = vpop.f32.mrf.mxu0
      %v460 = vadd.f32 0.0, %v459
      %461 = vmatmul.f32.gmra.mxu0 %v355
      %v462 = vpop.f32.mrf.mxu0
      %v463 = vadd.f32 0.0, %v462
      %464 = vmatmul.f32.gmra.mxu0 %v357
      %v465 = vpop.f32.mrf.mxu0
      %v466 = vadd.f32 0.0, %v465
      %467 = vmatmul.f32.gmra.mxu0 %v359
      %v468 = vpop.f32.mrf.mxu0
      %v469 = vadd.f32 0.0, %v468
      %470 = vmatmul.f32.gmra.mxu0 %v361
      %v471 = vpop.f32.mrf.mxu0
      %v472 = vadd.f32 0.0, %v471
      %473 = vmatmul.f32.gmra.mxu0 %v363
      %v474 = vpop.f32.mrf.mxu0
      %v475 = vadd.f32 0.0, %v474
      %476 = vmatmul.f32.gmra.mxu0 %v365
      %v477 = vpop.f32.mrf.mxu0
      %v478 = vadd.f32 0.0, %v477
      %479 = vmatmul.f32.gmra.mxu0 %v367
      %v480 = vpop.f32.mrf.mxu0
      %v481 = vadd.f32 0.0, %v480
      %482 = vmatmul.f32.gmra.mxu0 %v369
      %v483 = vpop.f32.mrf.mxu0
      %v484 = vadd.f32 0.0, %v483
      %485 = vmatmul.f32.gmra.mxu0 %v371
      %v486 = vpop.f32.mrf.mxu0
      %v487 = vadd.f32 0.0, %v486
      %488 = vmatmul.f32.gmra.mxu0 %v373
      %v489 = vpop.f32.mrf.mxu0
      %v490 = vadd.f32 0.0, %v489
      %491 = vmatmul.f32.gmra.mxu0 %v375
      %v492 = vpop.f32.mrf.mxu0
      %v493 = vadd.f32 0.0, %v492
      %494 = vmatmul.f32.gmra.mxu0 %v377
      %v495 = vpop.f32.mrf.mxu0
      %v496 = vadd.f32 0.0, %v495
      %497 = vmatmul.f32.gmra.mxu0 %v379
      %v498 = vpop.f32.mrf.mxu0
      %v499 = vadd.f32 0.0, %v498
      %500 = vmatmul.f32.gmra.mxu0 %v381
      %v501 = vpop.f32.mrf.mxu0
      %v502 = vadd.f32 0.0, %v501
      %503 = vmatmul.f32.gmra.mxu0 %v383
      %v504 = vpop.f32.mrf.mxu0
      %v505 = vadd.f32 0.0, %v504
      %506 = vmatmul.f32.gmra.mxu0 %v385
      %v507 = vpop.f32.mrf.mxu0
      %v508 = vadd.f32 0.0, %v507
      %509 = vmatmul.f32.gmra.mxu0 %v387
      %v510 = vpop.f32.mrf.mxu0
      %v511 = vadd.f32 0.0, %v510
      %512 = vmatmul.f32.gmra.mxu0 %v389
      %v513 = vpop.f32.mrf.mxu0
      %v514 = vadd.f32 0.0, %v513
      %515 = vmatmul.f32.gmra.mxu0 %v391
      %v516 = vpop.f32.mrf.mxu0
      %v517 = vadd.f32 0.0, %v516
      %518 = vmatmul.f32.gmra.mxu0 %v393
      %v519 = vpop.f32.mrf.mxu0
      %v520 = vadd.f32 0.0, %v519
      %521 = vmatmul.f32.gmra.mxu0 %v395
      %v522 = vpop.f32.mrf.mxu0
      %v523 = vadd.f32 0.0, %v522
      %524 = vmatmul.f32.gmra.mxu0 %v397
      %v525 = vpop.f32.mrf.mxu0
      %v526 = vadd.f32 0.0, %v525
      %527 = vdwg.mxu0
      %v528 = vsel %vm326, %v171, 0
      %v530 = vsel %vm326, %v172, 0
      %v532 = vsel %vm326, %v173, 0
      %v534 = vsel %vm326, %v174, 0
      %v536 = vsel %vm326, %v175, 0
      %v538 = vsel %vm326, %v176, 0
      %v540 = vsel %vm326, %v177, 0
      %v542 = vsel %vm326, %v178, 0
      %v544 = vsel %vm326, %v179, 0
      %v546 = vsel %vm326, %v180, 0
      %v548 = vsel %vm326, %v181, 0
      %v550 = vsel %vm326, %v182, 0
      %v552 = vsel %vm326, %v183, 0
      %v554 = vsel %vm326, %v184, 0
      %v556 = vsel %vm326, %v185, 0
      %v558 = vsel %vm326, %v186, 0
      %v560 = vsel %vm326, %v187, 0
      %v562 = vsel %vm326, %v188, 0
      %v564 = vsel %vm326, %v189, 0
      %v566 = vsel %vm326, %v190, 0
      %v568 = vsel %vm326, %v191, 0
      %v570 = vsel %vm326, %v192, 0
      %v572 = vsel %vm326, %v193, 0
      %v574 = vsel %vm326, %v194, 0
      %v576 = vsel %vm326, %v195, 0
      %v578 = vsel %vm326, %v196, 0
      %v580 = vsel %vm326, %v197, 0
      %v582 = vsel %vm326, %v198, 0
      %v584 = vsel %vm326, %v199, 0
      %v586 = vsel %vm326, %v200, 0
      %v588 = vsel %vm326, %v201, 0
      %v590 = vsel %vm326, %v202, 0
      %v592 = vsel %vm326, %v203, 0
      %v594 = vsel %vm326, %v204, 0
      %v596 = vsel %vm326, %v205, 0
      %v598 = vsel %vm326, %v206, 0
      %v601 = vsel %vm399, %v212, 0
      %603 = vmatpush.msra.mxu0 0.0
      %604 = vmatpush.msra.mxu0 0.0
      %605 = vmatpush.msra.mxu0 0.0
      %606 = vmatpush.msra.mxu0 0.0
      %607 = vmatpush.msra.mxu0 0.0
      %608 = vmatpush.msra.mxu0 0.0
      %609 = vmatpush.msra.mxu0 0.0
      %610 = vmatpush.msra.mxu0 0.0
      %611 = vmatpush.msra.mxu0 0.0
      %612 = vmatpush.msra.mxu0 0.0
      %613 = vmatpush.msra.mxu0 0.0
      %614 = vmatpush.msra.mxu0 0.0
      %615 = vmatpush.msra.mxu0 0.0
      %616 = vmatpush.msra.mxu0 0.0
      %617 = vmatpush.msra.mxu0 0.0
      %618 = vmatpush.msra.mxu0 %v601
      %619 = vmatmul.f32.gmra.mxu0 %v528
      %v620 = vpop.f32.mrf.mxu0
      %v621 = vadd.f32 %v421, %v620
      %622 = vmatmul.f32.gmra.mxu0 %v530
      %v623 = vpop.f32.mrf.mxu0
      %v624 = vadd.f32 %v424, %v623
      %625 = vmatmul.f32.gmra.mxu0 %v532
      %v626 = vpop.f32.mrf.mxu0
      %v627 = vadd.f32 %v427, %v626
      %628 = vmatmul.f32.gmra.mxu0 %v534
      %v629 = vpop.f32.mrf.mxu0
      %v630 = vadd.f32 %v430, %v629
      %631 = vmatmul.f32.gmra.mxu0 %v536
      %v632 = vpop.f32.mrf.mxu0
      %v633 = vadd.f32 %v433, %v632
      %634 = vmatmul.f32.gmra.mxu0 %v538
      %v635 = vpop.f32.mrf.mxu0
      %v636 = vadd.f32 %v436, %v635
      %637 = vmatmul.f32.gmra.mxu0 %v540
      %v638 = vpop.f32.mrf.mxu0
      %v639 = vadd.f32 %v439, %v638
      %640 = vmatmul.f32.gmra.mxu0 %v542
      %v641 = vpop.f32.mrf.mxu0
      %v642 = vadd.f32 %v442, %v641
      %643 = vmatmul.f32.gmra.mxu0 %v544
      %v644 = vpop.f32.mrf.mxu0
      %v645 = vadd.f32 %v445, %v644
      %646 = vmatmul.f32.gmra.mxu0 %v546
      %v647 = vpop.f32.mrf.mxu0
      %v648 = vadd.f32 %v448, %v647
      %649 = vmatmul.f32.gmra.mxu0 %v548
      %v650 = vpop.f32.mrf.mxu0
      %v651 = vadd.f32 %v451, %v650
      %652 = vmatmul.f32.gmra.mxu0 %v550
      %v653 = vpop.f32.mrf.mxu0
      %v654 = vadd.f32 %v454, %v653
      %655 = vmatmul.f32.gmra.mxu0 %v552
      %v656 = vpop.f32.mrf.mxu0
      %v657 = vadd.f32 %v457, %v656
      %658 = vmatmul.f32.gmra.mxu0 %v554
      %v659 = vpop.f32.mrf.mxu0
      %v660 = vadd.f32 %v460, %v659
      %661 = vmatmul.f32.gmra.mxu0 %v556
      %v662 = vpop.f32.mrf.mxu0
      %v663 = vadd.f32 %v463, %v662
      %664 = vmatmul.f32.gmra.mxu0 %v558
      %v665 = vpop.f32.mrf.mxu0
      %v666 = vadd.f32 %v466, %v665
      %667 = vmatmul.f32.gmra.mxu0 %v560
      %v668 = vpop.f32.mrf.mxu0
      %v669 = vadd.f32 %v469, %v668
      %670 = vmatmul.f32.gmra.mxu0 %v562
      %v671 = vpop.f32.mrf.mxu0
      %v672 = vadd.f32 %v472, %v671
      %673 = vmatmul.f32.gmra.mxu0 %v564
      %v674 = vpop.f32.mrf.mxu0
      %v675 = vadd.f32 %v475, %v674
      %676 = vmatmul.f32.gmra.mxu0 %v566
      %v677 = vpop.f32.mrf.mxu0
      %v678 = vadd.f32 %v478, %v677
      %679 = vmatmul.f32.gmra.mxu0 %v568
      %v680 = vpop.f32.mrf.mxu0
      %v681 = vadd.f32 %v481, %v680
      %682 = vmatmul.f32.gmra.mxu0 %v570
      %v683 = vpop.f32.mrf.mxu0
      %v684 = vadd.f32 %v484, %v683
      %685 = vmatmul.f32.gmra.mxu0 %v572
      %v686 = vpop.f32.mrf.mxu0
      %v687 = vadd.f32 %v487, %v686
      %688 = vmatmul.f32.gmra.mxu0 %v574
      %v689 = vpop.f32.mrf.mxu0
      %v690 = vadd.f32 %v490, %v689
      %691 = vmatmul.f32.gmra.mxu0 %v576
      %v692 = vpop.f32.mrf.mxu0
      %v693 = vadd.f32 %v493, %v692
      %694 = vmatmul.f32.gmra.mxu0 %v578
      %v695 = vpop.f32.mrf.mxu0
      %v696 = vadd.f32 %v496, %v695
      %697 = vmatmul.f32.gmra.mxu0 %v580
      %v698 = vpop.f32.mrf.mxu0
      %v699 = vadd.f32 %v499, %v698
      %700 = vmatmul.f32.gmra.mxu0 %v582
      %v701 = vpop.f32.mrf.mxu0
      %v702 = vadd.f32 %v502, %v701
      %703 = vmatmul.f32.gmra.mxu0 %v584
      %v704 = vpop.f32.mrf.mxu0
      %v705 = vadd.f32 %v505, %v704
      %706 = vmatmul.f32.gmra.mxu0 %v586
      %v707 = vpop.f32.mrf.mxu0
      %v708 = vadd.f32 %v508, %v707
      %709 = vmatmul.f32.gmra.mxu0 %v588
      %v710 = vpop.f32.mrf.mxu0
      %v711 = vadd.f32 %v511, %v710
      %712 = vmatmul.f32.gmra.mxu0 %v590
      %v713 = vpop.f32.mrf.mxu0
      %v714 = vadd.f32 %v514, %v713
      %715 = vmatmul.f32.gmra.mxu0 %v592
      %v716 = vpop.f32.mrf.mxu0
      %v717 = vadd.f32 %v517, %v716
      %718 = vmatmul.f32.gmra.mxu0 %v594
      %v719 = vpop.f32.mrf.mxu0
      %v720 = vadd.f32 %v520, %v719
      %721 = vmatmul.f32.gmra.mxu0 %v596
      %v722 = vpop.f32.mrf.mxu0
      %v723 = vadd.f32 %v523, %v722
      %724 = vmatmul.f32.gmra.mxu0 %v598
      %v725 = vpop.f32.mrf.mxu0
      %v726 = vadd.f32 %v526, %v725
      %727 = vdwg.mxu0
      %s728 = scalar_lea.vmem %s1, 8
      %v729 = vld [vmem:[%s728] sm:$0xf]
      %vm730 = vcmask 1045504
      %v731 = vrot.slane %v171, 2
      %v732 = vrot.slane %v172, 2
      %v733 = vsel %vm730, %v731, %v732
      %v734 = vrot.slane %v173, 2
      %v735 = vsel %vm730, %v732, %v734
      %v736 = vrot.slane %v174, 2
      %v737 = vsel %vm730, %v734, %v736
      %v738 = vrot.slane %v175, 2
      %v739 = vsel %vm730, %v736, %v738
      %v740 = vrot.slane %v176, 2
      %v741 = vsel %vm730, %v738, %v740
      %v742 = vrot.slane %v177, 2
      %v743 = vsel %vm730, %v740, %v742
      %v744 = vrot.slane %v178, 2
      %v745 = vsel %vm730, %v742, %v744
      %v746 = vrot.slane %v179, 2
      %v747 = vsel %vm730, %v744, %v746
      %v748 = vrot.slane %v180, 2
      %v749 = vsel %vm730, %v746, %v748
      %v750 = vrot.slane %v181, 2
      %v751 = vsel %vm730, %v748, %v750
      %v752 = vrot.slane %v182, 2
      %v753 = vsel %vm730, %v750, %v752
      %v754 = vrot.slane %v183, 2
      %v755 = vsel %vm730, %v752, %v754
      %v756 = vrot.slane %v184, 2
      %v757 = vsel %vm730, %v754, %v756
      %v758 = vrot.slane %v185, 2
      %v759 = vsel %vm730, %v756, %v758
      %v760 = vrot.slane %v186, 2
      %v761 = vsel %vm730, %v758, %v760
      %v762 = vrot.slane %v187, 2
      %v763 = vsel %vm730, %v760, %v762
      %v764 = vrot.slane %v188, 2
      %v765 = vsel %vm730, %v762, %v764
      %v766 = vrot.slane %v189, 2
      %v767 = vsel %vm730, %v764, %v766
      %v768 = vrot.slane %v190, 2
      %v769 = vsel %vm730, %v766, %v768
      %v770 = vrot.slane %v191, 2
      %v771 = vsel %vm730, %v768, %v770
      %v772 = vrot.slane %v192, 2
      %v773 = vsel %vm730, %v770, %v772
      %v774 = vrot.slane %v193, 2
      %v775 = vsel %vm730, %v772, %v774
      %v776 = vrot.slane %v194, 2
      %v777 = vsel %vm730, %v774, %v776
      %v778 = vrot.slane %v195, 2
      %v779 = vsel %vm730, %v776, %v778
      %v780 = vrot.slane %v196, 2
      %v781 = vsel %vm730, %v778, %v780
      %v782 = vrot.slane %v197, 2
      %v783 = vsel %vm730, %v780, %v782
      %v784 = vrot.slane %v198, 2
      %v785 = vsel %vm730, %v782, %v784
      %v786 = vrot.slane %v199, 2
      %v787 = vsel %vm730, %v784, %v786
      %v788 = vrot.slane %v200, 2
      %v789 = vsel %vm730, %v786, %v788
      %v790 = vrot.slane %v201, 2
      %v791 = vsel %vm730, %v788, %v790
      %v792 = vrot.slane %v202, 2
      %v793 = vsel %vm730, %v790, %v792
      %v794 = vrot.slane %v203, 2
      %v795 = vsel %vm730, %v792, %v794
      %v796 = vrot.slane %v204, 2
      %v797 = vsel %vm730, %v794, %v796
      %v798 = vrot.slane %v205, 2
      %v799 = vsel %vm730, %v796, %v798
      %v800 = vrot.slane %v206, 2
      %v801 = vsel %vm730, %v798, %v800
      %v802 = vrot.slane %v207, 2
      %v803 = vsel %vm730, %v800, %v802
      %v804 = vsel %vm326, %v733, 0
      %v806 = vsel %vm326, %v735, 0
      %v808 = vsel %vm326, %v737, 0
      %v810 = vsel %vm326, %v739, 0
      %v812 = vsel %vm326, %v741, 0
      %v814 = vsel %vm326, %v743, 0
      %v816 = vsel %vm326, %v745, 0
      %v818 = vsel %vm326, %v747, 0
      %v820 = vsel %vm326, %v749, 0
      %v822 = vsel %vm326, %v751, 0
      %v824 = vsel %vm326, %v753, 0
      %v826 = vsel %vm326, %v755, 0
      %v828 = vsel %vm326, %v757, 0
      %v830 = vsel %vm326, %v759, 0
      %v832 = vsel %vm326, %v761, 0
      %v834 = vsel %vm326, %v763, 0
      %v836 = vsel %vm326, %v765, 0
      %v838 = vsel %vm326, %v767, 0
      %v840 = vsel %vm326, %v769, 0
      %v842 = vsel %vm326, %v771, 0
      %v844 = vsel %vm326, %v773, 0
      %v846 = vsel %vm326, %v775, 0
      %v848 = vsel %vm326, %v777, 0
      %v850 = vsel %vm326, %v779, 0
      %v852 = vsel %vm326, %v781, 0
      %v854 = vsel %vm326, %v783, 0
      %v856 = vsel %vm326, %v785, 0
      %v858 = vsel %vm326, %v787, 0
      %v860 = vsel %vm326, %v789, 0
      %v862 = vsel %vm326, %v791, 0
      %v864 = vsel %vm326, %v793, 0
      %v866 = vsel %vm326, %v795, 0
      %v868 = vsel %vm326, %v797, 0
      %v870 = vsel %vm326, %v799, 0
      %v872 = vsel %vm326, %v801, 0
      %v874 = vsel %vm326, %v803, 0
      %v877 = vsel %vm399, %v729, 0
      %879 = vmatpush.msra.mxu0 0.0
      %880 = vmatpush.msra.mxu0 0.0
      %881 = vmatpush.msra.mxu0 0.0
      %882 = vmatpush.msra.mxu0 0.0
      %883 = vmatpush.msra.mxu0 0.0
      %884 = vmatpush.msra.mxu0 0.0
      %885 = vmatpush.msra.mxu0 0.0
      %886 = vmatpush.msra.mxu0 0.0
      %887 = vmatpush.msra.mxu0 0.0
      %888 = vmatpush.msra.mxu0 0.0
      %889 = vmatpush.msra.mxu0 0.0
      %890 = vmatpush.msra.mxu0 0.0
      %891 = vmatpush.msra.mxu0 0.0
      %892 = vmatpush.msra.mxu0 0.0
      %893 = vmatpush.msra.mxu0 0.0
      %894 = vmatpush.msra.mxu0 %v877
      %895 = vmatmul.f32.gmra.mxu0 %v804
      %v896 = vpop.f32.mrf.mxu0
      %v897 = vadd.f32 0.0, %v896
      %898 = vmatmul.f32.gmra.mxu0 %v806
      %v899 = vpop.f32.mrf.mxu0
      %v900 = vadd.f32 0.0, %v899
      %901 = vmatmul.f32.gmra.mxu0 %v808
      %v902 = vpop.f32.mrf.mxu0
      %v903 = vadd.f32 0.0, %v902
      %904 = vmatmul.f32.gmra.mxu0 %v810
      %v905 = vpop.f32.mrf.mxu0
      %v906 = vadd.f32 0.0, %v905
      %907 = vmatmul.f32.gmra.mxu0 %v812
      %v908 = vpop.f32.mrf.mxu0
      %v909 = vadd.f32 0.0, %v908
      %910 = vmatmul.f32.gmra.mxu0 %v814
      %v911 = vpop.f32.mrf.mxu0
      %v912 = vadd.f32 0.0, %v911
      %913 = vmatmul.f32.gmra.mxu0 %v816
      %v914 = vpop.f32.mrf.mxu0
      %v915 = vadd.f32 0.0, %v914
      %916 = vmatmul.f32.gmra.mxu0 %v818
      %v917 = vpop.f32.mrf.mxu0
      %v918 = vadd.f32 0.0, %v917
      %919 = vmatmul.f32.gmra.mxu0 %v820
      %v920 = vpop.f32.mrf.mxu0
      %v921 = vadd.f32 0.0, %v920
      %922 = vmatmul.f32.gmra.mxu0 %v822
      %v923 = vpop.f32.mrf.mxu0
      %v924 = vadd.f32 0.0, %v923
      %925 = vmatmul.f32.gmra.mxu0 %v824
      %v926 = vpop.f32.mrf.mxu0
      %v927 = vadd.f32 0.0, %v926
      %928 = vmatmul.f32.gmra.mxu0 %v826
      %v929 = vpop.f32.mrf.mxu0
      %v930 = vadd.f32 0.0, %v929
      %931 = vmatmul.f32.gmra.mxu0 %v828
      %v932 = vpop.f32.mrf.mxu0
      %v933 = vadd.f32 0.0, %v932
      %934 = vmatmul.f32.gmra.mxu0 %v830
      %v935 = vpop.f32.mrf.mxu0
      %v936 = vadd.f32 0.0, %v935
      %937 = vmatmul.f32.gmra.mxu0 %v832
      %v938 = vpop.f32.mrf.mxu0
      %v939 = vadd.f32 0.0, %v938
      %940 = vmatmul.f32.gmra.mxu0 %v834
      %v941 = vpop.f32.mrf.mxu0
      %v942 = vadd.f32 0.0, %v941
      %943 = vmatmul.f32.gmra.mxu0 %v836
      %v944 = vpop.f32.mrf.mxu0
      %v945 = vadd.f32 0.0, %v944
      %946 = vmatmul.f32.gmra.mxu0 %v838
      %v947 = vpop.f32.mrf.mxu0
      %v948 = vadd.f32 0.0, %v947
      %949 = vmatmul.f32.gmra.mxu0 %v840
      %v950 = vpop.f32.mrf.mxu0
      %v951 = vadd.f32 0.0, %v950
      %952 = vmatmul.f32.gmra.mxu0 %v842
      %v953 = vpop.f32.mrf.mxu0
      %v954 = vadd.f32 0.0, %v953
      %955 = vmatmul.f32.gmra.mxu0 %v844
      %v956 = vpop.f32.mrf.mxu0
      %v957 = vadd.f32 0.0, %v956
      %958 = vmatmul.f32.gmra.mxu0 %v846
      %v959 = vpop.f32.mrf.mxu0
      %v960 = vadd.f32 0.0, %v959
      %961 = vmatmul.f32.gmra.mxu0 %v848
      %v962 = vpop.f32.mrf.mxu0
      %v963 = vadd.f32 0.0, %v962
      %964 = vmatmul.f32.gmra.mxu0 %v850
      %v965 = vpop.f32.mrf.mxu0
      %v966 = vadd.f32 0.0, %v965
      %967 = vmatmul.f32.gmra.mxu0 %v852
      %v968 = vpop.f32.mrf.mxu0
      %v969 = vadd.f32 0.0, %v968
      %970 = vmatmul.f32.gmra.mxu0 %v854
      %v971 = vpop.f32.mrf.mxu0
      %v972 = vadd.f32 0.0, %v971
      %973 = vmatmul.f32.gmra.mxu0 %v856
      %v974 = vpop.f32.mrf.mxu0
      %v975 = vadd.f32 0.0, %v974
      %976 = vmatmul.f32.gmra.mxu0 %v858
      %v977 = vpop.f32.mrf.mxu0
      %v978 = vadd.f32 0.0, %v977
      %979 = vmatmul.f32.gmra.mxu0 %v860
      %v980 = vpop.f32.mrf.mxu0
      %v981 = vadd.f32 0.0, %v980
      %982 = vmatmul.f32.gmra.mxu0 %v862
      %v983 = vpop.f32.mrf.mxu0
      %v984 = vadd.f32 0.0, %v983
      %985 = vmatmul.f32.gmra.mxu0 %v864
      %v986 = vpop.f32.mrf.mxu0
      %v987 = vadd.f32 0.0, %v986
      %988 = vmatmul.f32.gmra.mxu0 %v866
      %v989 = vpop.f32.mrf.mxu0
      %v990 = vadd.f32 0.0, %v989
      %991 = vmatmul.f32.gmra.mxu0 %v868
      %v992 = vpop.f32.mrf.mxu0
      %v993 = vadd.f32 0.0, %v992
      %994 = vmatmul.f32.gmra.mxu0 %v870
      %v995 = vpop.f32.mrf.mxu0
      %v996 = vadd.f32 0.0, %v995
      %997 = vmatmul.f32.gmra.mxu0 %v872
      %v998 = vpop.f32.mrf.mxu0
      %v999 = vadd.f32 0.0, %v998
      %1000 = vmatmul.f32.gmra.mxu0 %v874
      %v1001 = vpop.f32.mrf.mxu0
      %v1002 = vadd.f32 0.0, %v1001
      %1003 = vdwg.mxu0
      %v1004 = vadd.f32 %v621, %v897
      %v1005 = vadd.f32 %v624, %v900
      %v1006 = vadd.f32 %v627, %v903
      %v1007 = vadd.f32 %v630, %v906
      %v1008 = vadd.f32 %v633, %v909
      %v1009 = vadd.f32 %v636, %v912
      %v1010 = vadd.f32 %v639, %v915
      %v1011 = vadd.f32 %v642, %v918
      %v1012 = vadd.f32 %v645, %v921
      %v1013 = vadd.f32 %v648, %v924
      %v1014 = vadd.f32 %v651, %v927
      %v1015 = vadd.f32 %v654, %v930
      %v1016 = vadd.f32 %v657, %v933
      %v1017 = vadd.f32 %v660, %v936
      %v1018 = vadd.f32 %v663, %v939
      %v1019 = vadd.f32 %v666, %v942
      %v1020 = vadd.f32 %v669, %v945
      %v1021 = vadd.f32 %v672, %v948
      %v1022 = vadd.f32 %v675, %v951
      %v1023 = vadd.f32 %v678, %v954
      %v1024 = vadd.f32 %v681, %v957
      %v1025 = vadd.f32 %v684, %v960
      %v1026 = vadd.f32 %v687, %v963
      %v1027 = vadd.f32 %v690, %v966
      %v1028 = vadd.f32 %v693, %v969
      %v1029 = vadd.f32 %v696, %v972
      %v1030 = vadd.f32 %v699, %v975
      %v1031 = vadd.f32 %v702, %v978
      %v1032 = vadd.f32 %v705, %v981
      %v1033 = vadd.f32 %v708, %v984
      %v1034 = vadd.f32 %v711, %v987
      %v1035 = vadd.f32 %v714, %v990
      %v1036 = vadd.f32 %v717, %v993
      %v1037 = vadd.f32 %v720, %v996
      %v1038 = vadd.f32 %v723, %v999
      %v1039 = vadd.f32 %v726, %v1002
      %s1040 = scalar_lea.vmem %s1, 12
      %v1041 = vld [vmem:[%s1040] sm:$0xf]
      %v1044 = vrot.slane %v208, 2
      %v1045 = vsel %vm730, %v802, %v1044
      %v1046 = vrot.slane %v209, 2
      %v1047 = vsel %vm730, %v1044, %v1046
      %v1048 = vsel %vm326, %v1045, 0
      %v1050 = vsel %vm326, %v1047, 0
      %v1053 = vsel %vm399, %v1041, 0
      %1055 = vmatpush.msra.mxu0 0.0
      %1056 = vmatpush.msra.mxu0 0.0
      %1057 = vmatpush.msra.mxu0 0.0
      %1058 = vmatpush.msra.mxu0 0.0
      %1059 = vmatpush.msra.mxu0 0.0
      %1060 = vmatpush.msra.mxu0 0.0
      %1061 = vmatpush.msra.mxu0 0.0
      %1062 = vmatpush.msra.mxu0 0.0
      %1063 = vmatpush.msra.mxu0 0.0
      %1064 = vmatpush.msra.mxu0 0.0
      %1065 = vmatpush.msra.mxu0 0.0
      %1066 = vmatpush.msra.mxu0 0.0
      %1067 = vmatpush.msra.mxu0 0.0
      %1068 = vmatpush.msra.mxu0 0.0
      %1069 = vmatpush.msra.mxu0 0.0
      %1070 = vmatpush.msra.mxu0 %v1053
      %1071 = vmatmul.f32.gmra.mxu0 %v808
      %v1072 = vpop.f32.mrf.mxu0
      %v1073 = vadd.f32 0.0, %v1072
      %1074 = vmatmul.f32.gmra.mxu0 %v810
      %v1075 = vpop.f32.mrf.mxu0
      %v1076 = vadd.f32 0.0, %v1075
      %1077 = vmatmul.f32.gmra.mxu0 %v812
      %v1078 = vpop.f32.mrf.mxu0
      %v1079 = vadd.f32 0.0, %v1078
      %1080 = vmatmul.f32.gmra.mxu0 %v814
      %v1081 = vpop.f32.mrf.mxu0
      %v1082 = vadd.f32 0.0, %v1081
      %1083 = vmatmul.f32.gmra.mxu0 %v816
      %v1084 = vpop.f32.mrf.mxu0
      %v1085 = vadd.f32 0.0, %v1084
      %1086 = vmatmul.f32.gmra.mxu0 %v818
      %v1087 = vpop.f32.mrf.mxu0
      %v1088 = vadd.f32 0.0, %v1087
      %1089 = vmatmul.f32.gmra.mxu0 %v820
      %v1090 = vpop.f32.mrf.mxu0
      %v1091 = vadd.f32 0.0, %v1090
      %1092 = vmatmul.f32.gmra.mxu0 %v822
      %v1093 = vpop.f32.mrf.mxu0
      %v1094 = vadd.f32 0.0, %v1093
      %1095 = vmatmul.f32.gmra.mxu0 %v824
      %v1096 = vpop.f32.mrf.mxu0
      %v1097 = vadd.f32 0.0, %v1096
      %1098 = vmatmul.f32.gmra.mxu0 %v826
      %v1099 = vpop.f32.mrf.mxu0
      %v1100 = vadd.f32 0.0, %v1099
      %1101 = vmatmul.f32.gmra.mxu0 %v828
      %v1102 = vpop.f32.mrf.mxu0
      %v1103 = vadd.f32 0.0, %v1102
      %1104 = vmatmul.f32.gmra.mxu0 %v830
      %v1105 = vpop.f32.mrf.mxu0
      %v1106 = vadd.f32 0.0, %v1105
      %1107 = vmatmul.f32.gmra.mxu0 %v832
      %v1108 = vpop.f32.mrf.mxu0
      %v1109 = vadd.f32 0.0, %v1108
      %1110 = vmatmul.f32.gmra.mxu0 %v834
      %v1111 = vpop.f32.mrf.mxu0
      %v1112 = vadd.f32 0.0, %v1111
      %1113 = vmatmul.f32.gmra.mxu0 %v836
      %v1114 = vpop.f32.mrf.mxu0
      %v1115 = vadd.f32 0.0, %v1114
      %1116 = vmatmul.f32.gmra.mxu0 %v838
      %v1117 = vpop.f32.mrf.mxu0
      %v1118 = vadd.f32 0.0, %v1117
      %1119 = vmatmul.f32.gmra.mxu0 %v840
      %v1120 = vpop.f32.mrf.mxu0
      %v1121 = vadd.f32 0.0, %v1120
      %1122 = vmatmul.f32.gmra.mxu0 %v842
      %v1123 = vpop.f32.mrf.mxu0
      %v1124 = vadd.f32 0.0, %v1123
      %1125 = vmatmul.f32.gmra.mxu0 %v844
      %v1126 = vpop.f32.mrf.mxu0
      %v1127 = vadd.f32 0.0, %v1126
      %1128 = vmatmul.f32.gmra.mxu0 %v846
      %v1129 = vpop.f32.mrf.mxu0
      %v1130 = vadd.f32 0.0, %v1129
      %1131 = vmatmul.f32.gmra.mxu0 %v848
      %v1132 = vpop.f32.mrf.mxu0
      %v1133 = vadd.f32 0.0, %v1132
      %1134 = vmatmul.f32.gmra.mxu0 %v850
      %v1135 = vpop.f32.mrf.mxu0
      %v1136 = vadd.f32 0.0, %v1135
      %1137 = vmatmul.f32.gmra.mxu0 %v852
      %v1138 = vpop.f32.mrf.mxu0
      %v1139 = vadd.f32 0.0, %v1138
      %1140 = vmatmul.f32.gmra.mxu0 %v854
      %v1141 = vpop.f32.mrf.mxu0
      %v1142 = vadd.f32 0.0, %v1141
      %1143 = vmatmul.f32.gmra.mxu0 %v856
      %v1144 = vpop.f32.mrf.mxu0
      %v1145 = vadd.f32 0.0, %v1144
      %1146 = vmatmul.f32.gmra.mxu0 %v858
      %v1147 = vpop.f32.mrf.mxu0
      %v1148 = vadd.f32 0.0, %v1147
      %1149 = vmatmul.f32.gmra.mxu0 %v860
      %v1150 = vpop.f32.mrf.mxu0
      %v1151 = vadd.f32 0.0, %v1150
      %1152 = vmatmul.f32.gmra.mxu0 %v862
      %v1153 = vpop.f32.mrf.mxu0
      %v1154 = vadd.f32 0.0, %v1153
      %1155 = vmatmul.f32.gmra.mxu0 %v864
      %v1156 = vpop.f32.mrf.mxu0
      %v1157 = vadd.f32 0.0, %v1156
      %1158 = vmatmul.f32.gmra.mxu0 %v866
      %v1159 = vpop.f32.mrf.mxu0
      %v1160 = vadd.f32 0.0, %v1159
      %1161 = vmatmul.f32.gmra.mxu0 %v868
      %v1162 = vpop.f32.mrf.mxu0
      %v1163 = vadd.f32 0.0, %v1162
      %1164 = vmatmul.f32.gmra.mxu0 %v870
      %v1165 = vpop.f32.mrf.mxu0
      %v1166 = vadd.f32 0.0, %v1165
      %1167 = vmatmul.f32.gmra.mxu0 %v872
      %v1168 = vpop.f32.mrf.mxu0
      %v1169 = vadd.f32 0.0, %v1168
      %1170 = vmatmul.f32.gmra.mxu0 %v874
      %v1171 = vpop.f32.mrf.mxu0
      %v1172 = vadd.f32 0.0, %v1171
      %1173 = vmatmul.f32.gmra.mxu0 %v1048
      %v1174 = vpop.f32.mrf.mxu0
      %v1175 = vadd.f32 0.0, %v1174
      %1176 = vmatmul.f32.gmra.mxu0 %v1050
      %v1177 = vpop.f32.mrf.mxu0
      %v1178 = vadd.f32 0.0, %v1177
      %1179 = vdwg.mxu0
      %v1180 = vadd.f32 %v1004, %v1073
      %v1181 = vadd.f32 %v1005, %v1076
      %v1182 = vadd.f32 %v1006, %v1079
      %v1183 = vadd.f32 %v1007, %v1082
      %v1184 = vadd.f32 %v1008, %v1085
      %v1185 = vadd.f32 %v1009, %v1088
      %v1186 = vadd.f32 %v1010, %v1091
      %v1187 = vadd.f32 %v1011, %v1094
      %v1188 = vadd.f32 %v1012, %v1097
      %v1189 = vadd.f32 %v1013, %v1100
      %v1190 = vadd.f32 %v1014, %v1103
      %v1191 = vadd.f32 %v1015, %v1106
      %v1192 = vadd.f32 %v1016, %v1109
      %v1193 = vadd.f32 %v1017, %v1112
      %v1194 = vadd.f32 %v1018, %v1115
      %v1195 = vadd.f32 %v1019, %v1118
      %v1196 = vadd.f32 %v1020, %v1121
      %v1197 = vadd.f32 %v1021, %v1124
      %v1198 = vadd.f32 %v1022, %v1127
      %v1199 = vadd.f32 %v1023, %v1130
      %v1200 = vadd.f32 %v1024, %v1133
      %v1201 = vadd.f32 %v1025, %v1136
      %v1202 = vadd.f32 %v1026, %v1139
      %v1203 = vadd.f32 %v1027, %v1142
      %v1204 = vadd.f32 %v1028, %v1145
      %v1205 = vadd.f32 %v1029, %v1148
      %v1206 = vadd.f32 %v1030, %v1151
      %v1207 = vadd.f32 %v1031, %v1154
      %v1208 = vadd.f32 %v1032, %v1157
      %v1209 = vadd.f32 %v1033, %v1160
      %v1210 = vadd.f32 %v1034, %v1163
      %v1211 = vadd.f32 %v1035, %v1166
      %v1212 = vadd.f32 %v1036, %v1169
      %v1213 = vadd.f32 %v1037, %v1172
      %v1214 = vadd.f32 %v1038, %v1175
      %v1215 = vadd.f32 %v1039, %v1178
      %s1216 = scalar_lea.vmem %s1, 16
      %v1217 = vld [vmem:[%s1216] sm:$0xf]
      %vm1218 = vcmask 1044480
      %v1219 = vrot.slane %v173, 3
      %v1220 = vrot.slane %v174, 3
      %v1221 = vsel %vm1218, %v1219, %v1220
      %v1222 = vrot.slane %v175, 3
      %v1223 = vsel %vm1218, %v1220, %v1222
      %v1224 = vrot.slane %v176, 3
      %v1225 = vsel %vm1218, %v1222, %v1224
      %v1226 = vrot.slane %v177, 3
      %v1227 = vsel %vm1218, %v1224, %v1226
      %v1228 = vrot.slane %v178, 3
      %v1229 = vsel %vm1218, %v1226, %v1228
      %v1230 = vrot.slane %v179, 3
      %v1231 = vsel %vm1218, %v1228, %v1230
      %v1232 = vrot.slane %v180, 3
      %v1233 = vsel %vm1218, %v1230, %v1232
      %v1234 = vrot.slane %v181, 3
      %v1235 = vsel %vm1218, %v1232, %v1234
      %v1236 = vrot.slane %v182, 3
      %v1237 = vsel %vm1218, %v1234, %v1236
      %v1238 = vrot.slane %v183, 3
      %v1239 = vsel %vm1218, %v1236, %v1238
      %v1240 = vrot.slane %v184, 3
      %v1241 = vsel %vm1218, %v1238, %v1240
      %v1242 = vrot.slane %v185, 3
      %v1243 = vsel %vm1218, %v1240, %v1242
      %v1244 = vrot.slane %v186, 3
      %v1245 = vsel %vm1218, %v1242, %v1244
      %v1246 = vrot.slane %v187, 3
      %v1247 = vsel %vm1218, %v1244, %v1246
      %v1248 = vrot.slane %v188, 3
      %v1249 = vsel %vm1218, %v1246, %v1248
      %v1250 = vrot.slane %v189, 3
      %v1251 = vsel %vm1218, %v1248, %v1250
      %v1252 = vrot.slane %v190, 3
      %v1253 = vsel %vm1218, %v1250, %v1252
      %v1254 = vrot.slane %v191, 3
      %v1255 = vsel %vm1218, %v1252, %v1254
      %v1256 = vrot.slane %v192, 3
      %v1257 = vsel %vm1218, %v1254, %v1256
      %v1258 = vrot.slane %v193, 3
      %v1259 = vsel %vm1218, %v1256, %v1258
      %v1260 = vrot.slane %v194, 3
      %v1261 = vsel %vm1218, %v1258, %v1260
      %v1262 = vrot.slane %v195, 3
      %v1263 = vsel %vm1218, %v1260, %v1262
      %v1264 = vrot.slane %v196, 3
      %v1265 = vsel %vm1218, %v1262, %v1264
      %v1266 = vrot.slane %v197, 3
      %v1267 = vsel %vm1218, %v1264, %v1266
      %v1268 = vrot.slane %v198, 3
      %v1269 = vsel %vm1218, %v1266, %v1268
      %v1270 = vrot.slane %v199, 3
      %v1271 = vsel %vm1218, %v1268, %v1270
      %v1272 = vrot.slane %v200, 3
      %v1273 = vsel %vm1218, %v1270, %v1272
      %v1274 = vrot.slane %v201, 3
      %v1275 = vsel %vm1218, %v1272, %v1274
      %v1276 = vrot.slane %v202, 3
      %v1277 = vsel %vm1218, %v1274, %v1276
      %v1278 = vrot.slane %v203, 3
      %v1279 = vsel %vm1218, %v1276, %v1278
      %v1280 = vrot.slane %v204, 3
      %v1281 = vsel %vm1218, %v1278, %v1280
      %v1282 = vrot.slane %v205, 3
      %v1283 = vsel %vm1218, %v1280, %v1282
      %v1284 = vrot.slane %v206, 3
      %v1285 = vsel %vm1218, %v1282, %v1284
      %v1286 = vrot.slane %v207, 3
      %v1287 = vsel %vm1218, %v1284, %v1286
      %v1288 = vrot.slane %v208, 3
      %v1289 = vsel %vm1218, %v1286, %v1288
      %v1290 = vrot.slane %v209, 3
      %v1291 = vsel %vm1218, %v1288, %v1290
      %v1292 = vsel %vm326, %v1221, 0
      %v1294 = vsel %vm326, %v1223, 0
      %v1296 = vsel %vm326, %v1225, 0
      %v1298 = vsel %vm326, %v1227, 0
      %v1300 = vsel %vm326, %v1229, 0
      %v1302 = vsel %vm326, %v1231, 0
      %v1304 = vsel %vm326, %v1233, 0
      %v1306 = vsel %vm326, %v1235, 0
      %v1308 = vsel %vm326, %v1237, 0
      %v1310 = vsel %vm326, %v1239, 0
      %v1312 = vsel %vm326, %v1241, 0
      %v1314 = vsel %vm326, %v1243, 0
      %v1316 = vsel %vm326, %v1245, 0
      %v1318 = vsel %vm326, %v1247, 0
      %v1320 = vsel %vm326, %v1249, 0
      %v1322 = vsel %vm326, %v1251, 0
      %v1324 = vsel %vm326, %v1253, 0
      %v1326 = vsel %vm326, %v1255, 0
      %v1328 = vsel %vm326, %v1257, 0
      %v1330 = vsel %vm326, %v1259, 0
      %v1332 = vsel %vm326, %v1261, 0
      %v1334 = vsel %vm326, %v1263, 0
      %v1336 = vsel %vm326, %v1265, 0
      %v1338 = vsel %vm326, %v1267, 0
      %v1340 = vsel %vm326, %v1269, 0
      %v1342 = vsel %vm326, %v1271, 0
      %v1344 = vsel %vm326, %v1273, 0
      %v1346 = vsel %vm326, %v1275, 0
      %v1348 = vsel %vm326, %v1277, 0
      %v1350 = vsel %vm326, %v1279, 0
      %v1352 = vsel %vm326, %v1281, 0
      %v1354 = vsel %vm326, %v1283, 0
      %v1356 = vsel %vm326, %v1285, 0
      %v1358 = vsel %vm326, %v1287, 0
      %v1360 = vsel %vm326, %v1289, 0
      %v1362 = vsel %vm326, %v1291, 0
      %v1365 = vsel %vm399, %v1217, 0
      %1367 = vmatpush.msra.mxu0 0.0
      %1368 = vmatpush.msra.mxu0 0.0
      %1369 = vmatpush.msra.mxu0 0.0
      %1370 = vmatpush.msra.mxu0 0.0
      %1371 = vmatpush.msra.mxu0 0.0
      %1372 = vmatpush.msra.mxu0 0.0
      %1373 = vmatpush.msra.mxu0 0.0
      %1374 = vmatpush.msra.mxu0 0.0
      %1375 = vmatpush.msra.mxu0 0.0
      %1376 = vmatpush.msra.mxu0 0.0
      %1377 = vmatpush.msra.mxu0 0.0
      %1378 = vmatpush.msra.mxu0 0.0
      %1379 = vmatpush.msra.mxu0 0.0
      %1380 = vmatpush.msra.mxu0 0.0
      %1381 = vmatpush.msra.mxu0 0.0
      %1382 = vmatpush.msra.mxu0 %v1365
      %1383 = vmatmul.f32.gmra.mxu0 %v1292
      %v1384 = vpop.f32.mrf.mxu0
      %v1385 = vadd.f32 0.0, %v1384
      %1386 = vmatmul.f32.gmra.mxu0 %v1294
      %v1387 = vpop.f32.mrf.mxu0
      %v1388 = vadd.f32 0.0, %v1387
      %1389 = vmatmul.f32.gmra.mxu0 %v1296
      %v1390 = vpop.f32.mrf.mxu0
      %v1391 = vadd.f32 0.0, %v1390
      %1392 = vmatmul.f32.gmra.mxu0 %v1298
      %v1393 = vpop.f32.mrf.mxu0
      %v1394 = vadd.f32 0.0, %v1393
      %1395 = vmatmul.f32.gmra.mxu0 %v1300
      %v1396 = vpop.f32.mrf.mxu0
      %v1397 = vadd.f32 0.0, %v1396
      %1398 = vmatmul.f32.gmra.mxu0 %v1302
      %v1399 = vpop.f32.mrf.mxu0
      %v1400 = vadd.f32 0.0, %v1399
      %1401 = vmatmul.f32.gmra.mxu0 %v1304
      %v1402 = vpop.f32.mrf.mxu0
      %v1403 = vadd.f32 0.0, %v1402
      %1404 = vmatmul.f32.gmra.mxu0 %v1306
      %v1405 = vpop.f32.mrf.mxu0
      %v1406 = vadd.f32 0.0, %v1405
      %1407 = vmatmul.f32.gmra.mxu0 %v1308
      %v1408 = vpop.f32.mrf.mxu0
      %v1409 = vadd.f32 0.0, %v1408
      %1410 = vmatmul.f32.gmra.mxu0 %v1310
      %v1411 = vpop.f32.mrf.mxu0
      %v1412 = vadd.f32 0.0, %v1411
      %1413 = vmatmul.f32.gmra.mxu0 %v1312
      %v1414 = vpop.f32.mrf.mxu0
      %v1415 = vadd.f32 0.0, %v1414
      %1416 = vmatmul.f32.gmra.mxu0 %v1314
      %v1417 = vpop.f32.mrf.mxu0
      %v1418 = vadd.f32 0.0, %v1417
      %1419 = vmatmul.f32.gmra.mxu0 %v1316
      %v1420 = vpop.f32.mrf.mxu0
      %v1421 = vadd.f32 0.0, %v1420
      %1422 = vmatmul.f32.gmra.mxu0 %v1318
      %v1423 = vpop.f32.mrf.mxu0
      %v1424 = vadd.f32 0.0, %v1423
      %1425 = vmatmul.f32.gmra.mxu0 %v1320
      %v1426 = vpop.f32.mrf.mxu0
      %v1427 = vadd.f32 0.0, %v1426
      %1428 = vmatmul.f32.gmra.mxu0 %v1322
      %v1429 = vpop.f32.mrf.mxu0
      %v1430 = vadd.f32 0.0, %v1429
      %1431 = vmatmul.f32.gmra.mxu0 %v1324
      %v1432 = vpop.f32.mrf.mxu0
      %v1433 = vadd.f32 0.0, %v1432
      %1434 = vmatmul.f32.gmra.mxu0 %v1326
      %v1435 = vpop.f32.mrf.mxu0
      %v1436 = vadd.f32 0.0, %v1435
      %1437 = vmatmul.f32.gmra.mxu0 %v1328
      %v1438 = vpop.f32.mrf.mxu0
      %v1439 = vadd.f32 0.0, %v1438
      %1440 = vmatmul.f32.gmra.mxu0 %v1330
      %v1441 = vpop.f32.mrf.mxu0
      %v1442 = vadd.f32 0.0, %v1441
      %1443 = vmatmul.f32.gmra.mxu0 %v1332
      %v1444 = vpop.f32.mrf.mxu0
      %v1445 = vadd.f32 0.0, %v1444
      %1446 = vmatmul.f32.gmra.mxu0 %v1334
      %v1447 = vpop.f32.mrf.mxu0
      %v1448 = vadd.f32 0.0, %v1447
      %1449 = vmatmul.f32.gmra.mxu0 %v1336
      %v1450 = vpop.f32.mrf.mxu0
      %v1451 = vadd.f32 0.0, %v1450
      %1452 = vmatmul.f32.gmra.mxu0 %v1338
      %v1453 = vpop.f32.mrf.mxu0
      %v1454 = vadd.f32 0.0, %v1453
      %1455 = vmatmul.f32.gmra.mxu0 %v1340
      %v1456 = vpop.f32.mrf.mxu0
      %v1457 = vadd.f32 0.0, %v1456
      %1458 = vmatmul.f32.gmra.mxu0 %v1342
      %v1459 = vpop.f32.mrf.mxu0
      %v1460 = vadd.f32 0.0, %v1459
      %1461 = vmatmul.f32.gmra.mxu0 %v1344
      %v1462 = vpop.f32.mrf.mxu0
      %v1463 = vadd.f32 0.0, %v1462
      %1464 = vmatmul.f32.gmra.mxu0 %v1346
      %v1465 = vpop.f32.mrf.mxu0
      %v1466 = vadd.f32 0.0, %v1465
      %1467 = vmatmul.f32.gmra.mxu0 %v1348
      %v1468 = vpop.f32.mrf.mxu0
      %v1469 = vadd.f32 0.0, %v1468
      %1470 = vmatmul.f32.gmra.mxu0 %v1350
      %v1471 = vpop.f32.mrf.mxu0
      %v1472 = vadd.f32 0.0, %v1471
      %1473 = vmatmul.f32.gmra.mxu0 %v1352
      %v1474 = vpop.f32.mrf.mxu0
      %v1475 = vadd.f32 0.0, %v1474
      %1476 = vmatmul.f32.gmra.mxu0 %v1354
      %v1477 = vpop.f32.mrf.mxu0
      %v1478 = vadd.f32 0.0, %v1477
      %1479 = vmatmul.f32.gmra.mxu0 %v1356
      %v1480 = vpop.f32.mrf.mxu0
      %v1481 = vadd.f32 0.0, %v1480
      %1482 = vmatmul.f32.gmra.mxu0 %v1358
      %v1483 = vpop.f32.mrf.mxu0
      %v1484 = vadd.f32 0.0, %v1483
      %1485 = vmatmul.f32.gmra.mxu0 %v1360
      %v1486 = vpop.f32.mrf.mxu0
      %v1487 = vadd.f32 0.0, %v1486
      %1488 = vmatmul.f32.gmra.mxu0 %v1362
      %v1489 = vpop.f32.mrf.mxu0
      %v1490 = vadd.f32 0.0, %v1489
      %1491 = vdwg.mxu0
      %v1492 = vadd.f32 %v1180, %v1385
      %v1493 = vadd.f32 %v1181, %v1388
      %v1494 = vadd.f32 %v1182, %v1391
      %v1495 = vadd.f32 %v1183, %v1394
      %v1496 = vadd.f32 %v1184, %v1397
      %v1497 = vadd.f32 %v1185, %v1400
      %v1498 = vadd.f32 %v1186, %v1403
      %v1499 = vadd.f32 %v1187, %v1406
      %v1500 = vadd.f32 %v1188, %v1409
      %v1501 = vadd.f32 %v1189, %v1412
      %v1502 = vadd.f32 %v1190, %v1415
      %v1503 = vadd.f32 %v1191, %v1418
      %v1504 = vadd.f32 %v1192, %v1421
      %v1505 = vadd.f32 %v1193, %v1424
      %v1506 = vadd.f32 %v1194, %v1427
      %v1507 = vadd.f32 %v1195, %v1430
      %v1508 = vadd.f32 %v1196, %v1433
      %v1509 = vadd.f32 %v1197, %v1436
      %v1510 = vadd.f32 %v1198, %v1439
      %v1511 = vadd.f32 %v1199, %v1442
      %v1512 = vadd.f32 %v1200, %v1445
      %v1513 = vadd.f32 %v1201, %v1448
      %v1514 = vadd.f32 %v1202, %v1451
      %v1515 = vadd.f32 %v1203, %v1454
      %v1516 = vadd.f32 %v1204, %v1457
      %v1517 = vadd.f32 %v1205, %v1460
      %v1518 = vadd.f32 %v1206, %v1463
      %v1519 = vadd.f32 %v1207, %v1466
      %v1520 = vadd.f32 %v1208, %v1469
      %v1521 = vadd.f32 %v1209, %v1472
      %v1522 = vadd.f32 %v1210, %v1475
      %v1523 = vadd.f32 %v1211, %v1478
      %v1524 = vadd.f32 %v1212, %v1481
      %v1525 = vadd.f32 %v1213, %v1484
      %v1526 = vadd.f32 %v1214, %v1487
      %v1527 = vadd.f32 %v1215, %v1490
      %s1528 = scalar_lea.vmem %s1, 20
      %v1529 = vld [vmem:[%s1528] sm:$0xf]
      %v1530 = vrot.slane %v173, 4
      %v1531 = vrot.slane %v174, 4
      %v1532 = vsel %vm399, %v1530, %v1531
      %v1533 = vrot.slane %v175, 4
      %v1534 = vsel %vm399, %v1531, %v1533
      %v1535 = vrot.slane %v176, 4
      %v1536 = vsel %vm399, %v1533, %v1535
      %v1537 = vrot.slane %v177, 4
      %v1538 = vsel %vm399, %v1535, %v1537
      %v1539 = vrot.slane %v178, 4
      %v1540 = vsel %vm399, %v1537, %v1539
      %v1541 = vrot.slane %v179, 4
      %v1542 = vsel %vm399, %v1539, %v1541
      %v1543 = vrot.slane %v180, 4
      %v1544 = vsel %vm399, %v1541, %v1543
      %v1545 = vrot.slane %v181, 4
      %v1546 = vsel %vm399, %v1543, %v1545
      %v1547 = vrot.slane %v182, 4
      %v1548 = vsel %vm399, %v1545, %v1547
      %v1549 = vrot.slane %v183, 4
      %v1550 = vsel %vm399, %v1547, %v1549
      %v1551 = vrot.slane %v184, 4
      %v1552 = vsel %vm399, %v1549, %v1551
      %v1553 = vrot.slane %v185, 4
      %v1554 = vsel %vm399, %v1551, %v1553
      %v1555 = vrot.slane %v186, 4
      %v1556 = vsel %vm399, %v1553, %v1555
      %v1557 = vrot.slane %v187, 4
      %v1558 = vsel %vm399, %v1555, %v1557
      %v1559 = vrot.slane %v188, 4
      %v1560 = vsel %vm399, %v1557, %v1559
      %v1561 = vrot.slane %v189, 4
      %v1562 = vsel %vm399, %v1559, %v1561
      %v1563 = vrot.slane %v190, 4
      %v1564 = vsel %vm399, %v1561, %v1563
      %v1565 = vrot.slane %v191, 4
      %v1566 = vsel %vm399, %v1563, %v1565
      %v1567 = vrot.slane %v192, 4
      %v1568 = vsel %vm399, %v1565, %v1567
      %v1569 = vrot.slane %v193, 4
      %v1570 = vsel %vm399, %v1567, %v1569
      %v1571 = vrot.slane %v194, 4
      %v1572 = vsel %vm399, %v1569, %v1571
      %v1573 = vrot.slane %v195, 4
      %v1574 = vsel %vm399, %v1571, %v1573
      %v1575 = vrot.slane %v196, 4
      %v1576 = vsel %vm399, %v1573, %v1575
      %v1577 = vrot.slane %v197, 4
      %v1578 = vsel %vm399, %v1575, %v1577
      %v1579 = vrot.slane %v198, 4
      %v1580 = vsel %vm399, %v1577, %v1579
      %v1581 = vrot.slane %v199, 4
      %v1582 = vsel %vm399, %v1579, %v1581
      %v1583 = vrot.slane %v200, 4
      %v1584 = vsel %vm399, %v1581, %v1583
      %v1585 = vrot.slane %v201, 4
      %v1586 = vsel %vm399, %v1583, %v1585
      %v1587 = vrot.slane %v202, 4
      %v1588 = vsel %vm399, %v1585, %v1587
      %v1589 = vrot.slane %v203, 4
      %v1590 = vsel %vm399, %v1587, %v1589
      %v1591 = vrot.slane %v204, 4
      %v1592 = vsel %vm399, %v1589, %v1591
      %v1593 = vrot.slane %v205, 4
      %v1594 = vsel %vm399, %v1591, %v1593
      %v1595 = vrot.slane %v206, 4
      %v1596 = vsel %vm399, %v1593, %v1595
      %v1597 = vrot.slane %v207, 4
      %v1598 = vsel %vm399, %v1595, %v1597
      %v1599 = vrot.slane %v208, 4
      %v1600 = vsel %vm399, %v1597, %v1599
      %v1601 = vrot.slane %v209, 4
      %v1602 = vsel %vm399, %v1599, %v1601
      %v1603 = vsel %vm326, %v1532, 0
      %v1605 = vsel %vm326, %v1534, 0
      %v1607 = vsel %vm326, %v1536, 0
      %v1609 = vsel %vm326, %v1538, 0
      %v1611 = vsel %vm326, %v1540, 0
      %v1613 = vsel %vm326, %v1542, 0
      %v1615 = vsel %vm326, %v1544, 0
      %v1617 = vsel %vm326, %v1546, 0
      %v1619 = vsel %vm326, %v1548, 0
      %v1621 = vsel %vm326, %v1550, 0
      %v1623 = vsel %vm326, %v1552, 0
      %v1625 = vsel %vm326, %v1554, 0
      %v1627 = vsel %vm326, %v1556, 0
      %v1629 = vsel %vm326, %v1558, 0
      %v1631 = vsel %vm326, %v1560, 0
      %v1633 = vsel %vm326, %v1562, 0
      %v1635 = vsel %vm326, %v1564, 0
      %v1637 = vsel %vm326, %v1566, 0
      %v1639 = vsel %vm326, %v1568, 0
      %v1641 = vsel %vm326, %v1570, 0
      %v1643 = vsel %vm326, %v1572, 0
      %v1645 = vsel %vm326, %v1574, 0
      %v1647 = vsel %vm326, %v1576, 0
      %v1649 = vsel %vm326, %v1578, 0
      %v1651 = vsel %vm326, %v1580, 0
      %v1653 = vsel %vm326, %v1582, 0
      %v1655 = vsel %vm326, %v1584, 0
      %v1657 = vsel %vm326, %v1586, 0
      %v1659 = vsel %vm326, %v1588, 0
      %v1661 = vsel %vm326, %v1590, 0
      %v1663 = vsel %vm326, %v1592, 0
      %v1665 = vsel %vm326, %v1594, 0
      %v1667 = vsel %vm326, %v1596, 0
      %v1669 = vsel %vm326, %v1598, 0
      %v1671 = vsel %vm326, %v1600, 0
      %v1673 = vsel %vm326, %v1602, 0
      %v1676 = vsel %vm399, %v1529, 0
      %1678 = vmatpush.msra.mxu0 0.0
      %1679 = vmatpush.msra.mxu0 0.0
      %1680 = vmatpush.msra.mxu0 0.0
      %1681 = vmatpush.msra.mxu0 0.0
      %1682 = vmatpush.msra.mxu0 0.0
      %1683 = vmatpush.msra.mxu0 0.0
      %1684 = vmatpush.msra.mxu0 0.0
      %1685 = vmatpush.msra.mxu0 0.0
      %1686 = vmatpush.msra.mxu0 0.0
      %1687 = vmatpush.msra.mxu0 0.0
      %1688 = vmatpush.msra.mxu0 0.0
      %1689 = vmatpush.msra.mxu0 0.0
      %1690 = vmatpush.msra.mxu0 0.0
      %1691 = vmatpush.msra.mxu0 0.0
      %1692 = vmatpush.msra.mxu0 0.0
      %1693 = vmatpush.msra.mxu0 %v1676
      %1694 = vmatmul.f32.gmra.mxu0 %v1603
      %v1695 = vpop.f32.mrf.mxu0
      %v1696 = vadd.f32 0.0, %v1695
      %1697 = vmatmul.f32.gmra.mxu0 %v1605
      %v1698 = vpop.f32.mrf.mxu0
      %v1699 = vadd.f32 0.0, %v1698
      %1700 = vmatmul.f32.gmra.mxu0 %v1607
      %v1701 = vpop.f32.mrf.mxu0
      %v1702 = vadd.f32 0.0, %v1701
      %1703 = vmatmul.f32.gmra.mxu0 %v1609
      %v1704 = vpop.f32.mrf.mxu0
      %v1705 = vadd.f32 0.0, %v1704
      %1706 = vmatmul.f32.gmra.mxu0 %v1611
      %v1707 = vpop.f32.mrf.mxu0
      %v1708 = vadd.f32 0.0, %v1707
      %1709 = vmatmul.f32.gmra.mxu0 %v1613
      %v1710 = vpop.f32.mrf.mxu0
      %v1711 = vadd.f32 0.0, %v1710
      %1712 = vmatmul.f32.gmra.mxu0 %v1615
      %v1713 = vpop.f32.mrf.mxu0
      %v1714 = vadd.f32 0.0, %v1713
      %1715 = vmatmul.f32.gmra.mxu0 %v1617
      %v1716 = vpop.f32.mrf.mxu0
      %v1717 = vadd.f32 0.0, %v1716
      %1718 = vmatmul.f32.gmra.mxu0 %v1619
      %v1719 = vpop.f32.mrf.mxu0
      %v1720 = vadd.f32 0.0, %v1719
      %1721 = vmatmul.f32.gmra.mxu0 %v1621
      %v1722 = vpop.f32.mrf.mxu0
      %v1723 = vadd.f32 0.0, %v1722
      %1724 = vmatmul.f32.gmra.mxu0 %v1623
      %v1725 = vpop.f32.mrf.mxu0
      %v1726 = vadd.f32 0.0, %v1725
      %1727 = vmatmul.f32.gmra.mxu0 %v1625
      %v1728 = vpop.f32.mrf.mxu0
      %v1729 = vadd.f32 0.0, %v1728
      %1730 = vmatmul.f32.gmra.mxu0 %v1627
      %v1731 = vpop.f32.mrf.mxu0
      %v1732 = vadd.f32 0.0, %v1731
      %1733 = vmatmul.f32.gmra.mxu0 %v1629
      %v1734 = vpop.f32.mrf.mxu0
      %v1735 = vadd.f32 0.0, %v1734
      %1736 = vmatmul.f32.gmra.mxu0 %v1631
      %v1737 = vpop.f32.mrf.mxu0
      %v1738 = vadd.f32 0.0, %v1737
      %1739 = vmatmul.f32.gmra.mxu0 %v1633
      %v1740 = vpop.f32.mrf.mxu0
      %v1741 = vadd.f32 0.0, %v1740
      %1742 = vmatmul.f32.gmra.mxu0 %v1635
      %v1743 = vpop.f32.mrf.mxu0
      %v1744 = vadd.f32 0.0, %v1743
      %1745 = vmatmul.f32.gmra.mxu0 %v1637
      %v1746 = vpop.f32.mrf.mxu0
      %v1747 = vadd.f32 0.0, %v1746
      %1748 = vmatmul.f32.gmra.mxu0 %v1639
      %v1749 = vpop.f32.mrf.mxu0
      %v1750 = vadd.f32 0.0, %v1749
      %1751 = vmatmul.f32.gmra.mxu0 %v1641
      %v1752 = vpop.f32.mrf.mxu0
      %v1753 = vadd.f32 0.0, %v1752
      %1754 = vmatmul.f32.gmra.mxu0 %v1643
      %v1755 = vpop.f32.mrf.mxu0
      %v1756 = vadd.f32 0.0, %v1755
      %1757 = vmatmul.f32.gmra.mxu0 %v1645
      %v1758 = vpop.f32.mrf.mxu0
      %v1759 = vadd.f32 0.0, %v1758
      %1760 = vmatmul.f32.gmra.mxu0 %v1647
      %v1761 = vpop.f32.mrf.mxu0
      %v1762 = vadd.f32 0.0, %v1761
      %1763 = vmatmul.f32.gmra.mxu0 %v1649
      %v1764 = vpop.f32.mrf.mxu0
      %v1765 = vadd.f32 0.0, %v1764
      %1766 = vmatmul.f32.gmra.mxu0 %v1651
      %v1767 = vpop.f32.mrf.mxu0
      %v1768 = vadd.f32 0.0, %v1767
      %1769 = vmatmul.f32.gmra.mxu0 %v1653
      %v1770 = vpop.f32.mrf.mxu0
      %v1771 = vadd.f32 0.0, %v1770
      %1772 = vmatmul.f32.gmra.mxu0 %v1655
      %v1773 = vpop.f32.mrf.mxu0
      %v1774 = vadd.f32 0.0, %v1773
      %1775 = vmatmul.f32.gmra.mxu0 %v1657
      %v1776 = vpop.f32.mrf.mxu0
      %v1777 = vadd.f32 0.0, %v1776
      %1778 = vmatmul.f32.gmra.mxu0 %v1659
      %v1779 = vpop.f32.mrf.mxu0
      %v1780 = vadd.f32 0.0, %v1779
      %1781 = vmatmul.f32.gmra.mxu0 %v1661
      %v1782 = vpop.f32.mrf.mxu0
      %v1783 = vadd.f32 0.0, %v1782
      %1784 = vmatmul.f32.gmra.mxu0 %v1663
      %v1785 = vpop.f32.mrf.mxu0
      %v1786 = vadd.f32 0.0, %v1785
      %1787 = vmatmul.f32.gmra.mxu0 %v1665
      %v1788 = vpop.f32.mrf.mxu0
      %v1789 = vadd.f32 0.0, %v1788
      %1790 = vmatmul.f32.gmra.mxu0 %v1667
      %v1791 = vpop.f32.mrf.mxu0
      %v1792 = vadd.f32 0.0, %v1791
      %1793 = vmatmul.f32.gmra.mxu0 %v1669
      %v1794 = vpop.f32.mrf.mxu0
      %v1795 = vadd.f32 0.0, %v1794
      %1796 = vmatmul.f32.gmra.mxu0 %v1671
      %v1797 = vpop.f32.mrf.mxu0
      %v1798 = vadd.f32 0.0, %v1797
      %1799 = vmatmul.f32.gmra.mxu0 %v1673
      %v1800 = vpop.f32.mrf.mxu0
      %v1801 = vadd.f32 0.0, %v1800
      %1802 = vdwg.mxu0
      %v1803 = vadd.f32 %v1492, %v1696
      %v1804 = vadd.f32 %v1493, %v1699
      %v1805 = vadd.f32 %v1494, %v1702
      %v1806 = vadd.f32 %v1495, %v1705
      %v1807 = vadd.f32 %v1496, %v1708
      %v1808 = vadd.f32 %v1497, %v1711
      %v1809 = vadd.f32 %v1498, %v1714
      %v1810 = vadd.f32 %v1499, %v1717
      %v1811 = vadd.f32 %v1500, %v1720
      %v1812 = vadd.f32 %v1501, %v1723
      %v1813 = vadd.f32 %v1502, %v1726
      %v1814 = vadd.f32 %v1503, %v1729
      %v1815 = vadd.f32 %v1504, %v1732
      %v1816 = vadd.f32 %v1505, %v1735
      %v1817 = vadd.f32 %v1506, %v1738
      %v1818 = vadd.f32 %v1507, %v1741
      %v1819 = vadd.f32 %v1508, %v1744
      %v1820 = vadd.f32 %v1509, %v1747
      %v1821 = vadd.f32 %v1510, %v1750
      %v1822 = vadd.f32 %v1511, %v1753
      %v1823 = vadd.f32 %v1512, %v1756
      %v1824 = vadd.f32 %v1513, %v1759
      %v1825 = vadd.f32 %v1514, %v1762
      %v1826 = vadd.f32 %v1515, %v1765
      %v1827 = vadd.f32 %v1516, %v1768
      %v1828 = vadd.f32 %v1517, %v1771
      %v1829 = vadd.f32 %v1518, %v1774
      %v1830 = vadd.f32 %v1519, %v1777
      %v1831 = vadd.f32 %v1520, %v1780
      %v1832 = vadd.f32 %v1521, %v1783
      %v1833 = vadd.f32 %v1522, %v1786
      %v1834 = vadd.f32 %v1523, %v1789
      %v1835 = vadd.f32 %v1524, %v1792
      %v1836 = vadd.f32 %v1525, %v1795
      %v1837 = vadd.f32 %v1526, %v1798
      %v1838 = vadd.f32 %v1527, %v1801
      %s1839 = scalar_lea.vmem %s1, 24
      %v1840 = vld [vmem:[%s1839] sm:$0xf]
      %v1843 = vrot.slane %v210, 4
      %v1844 = vsel %vm399, %v1601, %v1843
      %v1845 = vrot.slane %v211, 4
      %v1846 = vsel %vm399, %v1843, %v1845
      %v1847 = vsel %vm326, %v1844, 0
      %v1849 = vsel %vm326, %v1846, 0
      %v1852 = vsel %vm399, %v1840, 0
      %1854 = vmatpush.msra.mxu0 0.0
      %1855 = vmatpush.msra.mxu0 0.0
      %1856 = vmatpush.msra.mxu0 0.0
      %1857 = vmatpush.msra.mxu0 0.0
      %1858 = vmatpush.msra.mxu0 0.0
      %1859 = vmatpush.msra.mxu0 0.0
      %1860 = vmatpush.msra.mxu0 0.0
      %1861 = vmatpush.msra.mxu0 0.0
      %1862 = vmatpush.msra.mxu0 0.0
      %1863 = vmatpush.msra.mxu0 0.0
      %1864 = vmatpush.msra.mxu0 0.0
      %1865 = vmatpush.msra.mxu0 0.0
      %1866 = vmatpush.msra.mxu0 0.0
      %1867 = vmatpush.msra.mxu0 0.0
      %1868 = vmatpush.msra.mxu0 0.0
      %1869 = vmatpush.msra.mxu0 %v1852
      %1870 = vmatmul.f32.gmra.mxu0 %v1607
      %v1871 = vpop.f32.mrf.mxu0
      %v1872 = vadd.f32 0.0, %v1871
      %1873 = vmatmul.f32.gmra.mxu0 %v1609
      %v1874 = vpop.f32.mrf.mxu0
      %v1875 = vadd.f32 0.0, %v1874
      %1876 = vmatmul.f32.gmra.mxu0 %v1611
      %v1877 = vpop.f32.mrf.mxu0
      %v1878 = vadd.f32 0.0, %v1877
      %1879 = vmatmul.f32.gmra.mxu0 %v1613
      %v1880 = vpop.f32.mrf.mxu0
      %v1881 = vadd.f32 0.0, %v1880
      %1882 = vmatmul.f32.gmra.mxu0 %v1615
      %v1883 = vpop.f32.mrf.mxu0
      %v1884 = vadd.f32 0.0, %v1883
      %1885 = vmatmul.f32.gmra.mxu0 %v1617
      %v1886 = vpop.f32.mrf.mxu0
      %v1887 = vadd.f32 0.0, %v1886
      %1888 = vmatmul.f32.gmra.mxu0 %v1619
      %v1889 = vpop.f32.mrf.mxu0
      %v1890 = vadd.f32 0.0, %v1889
      %1891 = vmatmul.f32.gmra.mxu0 %v1621
      %v1892 = vpop.f32.mrf.mxu0
      %v1893 = vadd.f32 0.0, %v1892
      %1894 = vmatmul.f32.gmra.mxu0 %v1623
      %v1895 = vpop.f32.mrf.mxu0
      %v1896 = vadd.f32 0.0, %v1895
      %1897 = vmatmul.f32.gmra.mxu0 %v1625
      %v1898 = vpop.f32.mrf.mxu0
      %v1899 = vadd.f32 0.0, %v1898
      %1900 = vmatmul.f32.gmra.mxu0 %v1627
      %v1901 = vpop.f32.mrf.mxu0
      %v1902 = vadd.f32 0.0, %v1901
      %1903 = vmatmul.f32.gmra.mxu0 %v1629
      %v1904 = vpop.f32.mrf.mxu0
      %v1905 = vadd.f32 0.0, %v1904
      %1906 = vmatmul.f32.gmra.mxu0 %v1631
      %v1907 = vpop.f32.mrf.mxu0
      %v1908 = vadd.f32 0.0, %v1907
      %1909 = vmatmul.f32.gmra.mxu0 %v1633
      %v1910 = vpop.f32.mrf.mxu0
      %v1911 = vadd.f32 0.0, %v1910
      %1912 = vmatmul.f32.gmra.mxu0 %v1635
      %v1913 = vpop.f32.mrf.mxu0
      %v1914 = vadd.f32 0.0, %v1913
      %1915 = vmatmul.f32.gmra.mxu0 %v1637
      %v1916 = vpop.f32.mrf.mxu0
      %v1917 = vadd.f32 0.0, %v1916
      %1918 = vmatmul.f32.gmra.mxu0 %v1639
      %v1919 = vpop.f32.mrf.mxu0
      %v1920 = vadd.f32 0.0, %v1919
      %1921 = vmatmul.f32.gmra.mxu0 %v1641
      %v1922 = vpop.f32.mrf.mxu0
      %v1923 = vadd.f32 0.0, %v1922
      %1924 = vmatmul.f32.gmra.mxu0 %v1643
      %v1925 = vpop.f32.mrf.mxu0
      %v1926 = vadd.f32 0.0, %v1925
      %1927 = vmatmul.f32.gmra.mxu0 %v1645
      %v1928 = vpop.f32.mrf.mxu0
      %v1929 = vadd.f32 0.0, %v1928
      %1930 = vmatmul.f32.gmra.mxu0 %v1647
      %v1931 = vpop.f32.mrf.mxu0
      %v1932 = vadd.f32 0.0, %v1931
      %1933 = vmatmul.f32.gmra.mxu0 %v1649
      %v1934 = vpop.f32.mrf.mxu0
      %v1935 = vadd.f32 0.0, %v1934
      %1936 = vmatmul.f32.gmra.mxu0 %v1651
      %v1937 = vpop.f32.mrf.mxu0
      %v1938 = vadd.f32 0.0, %v1937
      %1939 = vmatmul.f32.gmra.mxu0 %v1653
      %v1940 = vpop.f32.mrf.mxu0
      %v1941 = vadd.f32 0.0, %v1940
      %1942 = vmatmul.f32.gmra.mxu0 %v1655
      %v1943 = vpop.f32.mrf.mxu0
      %v1944 = vadd.f32 0.0, %v1943
      %1945 = vmatmul.f32.gmra.mxu0 %v1657
      %v1946 = vpop.f32.mrf.mxu0
      %v1947 = vadd.f32 0.0, %v1946
      %1948 = vmatmul.f32.gmra.mxu0 %v1659
      %v1949 = vpop.f32.mrf.mxu0
      %v1950 = vadd.f32 0.0, %v1949
      %1951 = vmatmul.f32.gmra.mxu0 %v1661
      %v1952 = vpop.f32.mrf.mxu0
      %v1953 = vadd.f32 0.0, %v1952
      %1954 = vmatmul.f32.gmra.mxu0 %v1663
      %v1955 = vpop.f32.mrf.mxu0
      %v1956 = vadd.f32 0.0, %v1955
      %1957 = vmatmul.f32.gmra.mxu0 %v1665
      %v1958 = vpop.f32.mrf.mxu0
      %v1959 = vadd.f32 0.0, %v1958
      %1960 = vmatmul.f32.gmra.mxu0 %v1667
      %v1961 = vpop.f32.mrf.mxu0
      %v1962 = vadd.f32 0.0, %v1961
      %1963 = vmatmul.f32.gmra.mxu0 %v1669
      %v1964 = vpop.f32.mrf.mxu0
      %v1965 = vadd.f32 0.0, %v1964
      %1966 = vmatmul.f32.gmra.mxu0 %v1671
      %v1967 = vpop.f32.mrf.mxu0
      %v1968 = vadd.f32 0.0, %v1967
      %1969 = vmatmul.f32.gmra.mxu0 %v1673
      %v1970 = vpop.f32.mrf.mxu0
      %v1971 = vadd.f32 0.0, %v1970
      %1972 = vmatmul.f32.gmra.mxu0 %v1847
      %v1973 = vpop.f32.mrf.mxu0
      %v1974 = vadd.f32 0.0, %v1973
      %1975 = vmatmul.f32.gmra.mxu0 %v1849
      %v1976 = vpop.f32.mrf.mxu0
      %v1977 = vadd.f32 0.0, %v1976
      %1978 = vdwg.mxu0
      %v1979 = vadd.f32 %v1803, %v1872
      %v1980 = vadd.f32 %v1804, %v1875
      %v1981 = vadd.f32 %v1805, %v1878
      %v1982 = vadd.f32 %v1806, %v1881
      %v1983 = vadd.f32 %v1807, %v1884
      %v1984 = vadd.f32 %v1808, %v1887
      %v1985 = vadd.f32 %v1809, %v1890
      %v1986 = vadd.f32 %v1810, %v1893
      %v1987 = vadd.f32 %v1811, %v1896
      %v1988 = vadd.f32 %v1812, %v1899
      %v1989 = vadd.f32 %v1813, %v1902
      %v1990 = vadd.f32 %v1814, %v1905
      %v1991 = vadd.f32 %v1815, %v1908
      %v1992 = vadd.f32 %v1816, %v1911
      %v1993 = vadd.f32 %v1817, %v1914
      %v1994 = vadd.f32 %v1818, %v1917
      %v1995 = vadd.f32 %v1819, %v1920
      %v1996 = vadd.f32 %v1820, %v1923
      %v1997 = vadd.f32 %v1821, %v1926
      %v1998 = vadd.f32 %v1822, %v1929
      %v1999 = vadd.f32 %v1823, %v1932
      %v2000 = vadd.f32 %v1824, %v1935
      %v2001 = vadd.f32 %v1825, %v1938
      %v2002 = vadd.f32 %v1826, %v1941
      %v2003 = vadd.f32 %v1827, %v1944
      %v2004 = vadd.f32 %v1828, %v1947
      %v2005 = vadd.f32 %v1829, %v1950
      %v2006 = vadd.f32 %v1830, %v1953
      %v2007 = vadd.f32 %v1831, %v1956
      %v2008 = vadd.f32 %v1832, %v1959
      %v2009 = vadd.f32 %v1833, %v1962
      %v2010 = vadd.f32 %v1834, %v1965
      %v2011 = vadd.f32 %v1835, %v1968
      %v2012 = vadd.f32 %v1836, %v1971
      %v2013 = vadd.f32 %v1837, %v1974
      %v2014 = vadd.f32 %v1838, %v1977
      %s2015 = scalar_lea.vmem %s1, 28
      %v2016 = vld [vmem:[%s2015] sm:$0xf]
      %vm2017 = vcmask 1042432
      %v2018 = vrot.slane %v175, 5
      %v2019 = vrot.slane %v176, 5
      %v2020 = vsel %vm2017, %v2018, %v2019
      %v2021 = vrot.slane %v177, 5
      %v2022 = vsel %vm2017, %v2019, %v2021
      %v2023 = vrot.slane %v178, 5
      %v2024 = vsel %vm2017, %v2021, %v2023
      %v2025 = vrot.slane %v179, 5
      %v2026 = vsel %vm2017, %v2023, %v2025
      %v2027 = vrot.slane %v180, 5
      %v2028 = vsel %vm2017, %v2025, %v2027
      %v2029 = vrot.slane %v181, 5
      %v2030 = vsel %vm2017, %v2027, %v2029
      %v2031 = vrot.slane %v182, 5
      %v2032 = vsel %vm2017, %v2029, %v2031
      %v2033 = vrot.slane %v183, 5
      %v2034 = vsel %vm2017, %v2031, %v2033
      %v2035 = vrot.slane %v184, 5
      %v2036 = vsel %vm2017, %v2033, %v2035
      %v2037 = vrot.slane %v185, 5
      %v2038 = vsel %vm2017, %v2035, %v2037
      %v2039 = vrot.slane %v186, 5
      %v2040 = vsel %vm2017, %v2037, %v2039
      %v2041 = vrot.slane %v187, 5
      %v2042 = vsel %vm2017, %v2039, %v2041
      %v2043 = vrot.slane %v188, 5
      %v2044 = vsel %vm2017, %v2041, %v2043
      %v2045 = vrot.slane %v189, 5
      %v2046 = vsel %vm2017, %v2043, %v2045
      %v2047 = vrot.slane %v190, 5
      %v2048 = vsel %vm2017, %v2045, %v2047
      %v2049 = vrot.slane %v191, 5
      %v2050 = vsel %vm2017, %v2047, %v2049
      %v2051 = vrot.slane %v192, 5
      %v2052 = vsel %vm2017, %v2049, %v2051
      %v2053 = vrot.slane %v193, 5
      %v2054 = vsel %vm2017, %v2051, %v2053
      %v2055 = vrot.slane %v194, 5
      %v2056 = vsel %vm2017, %v2053, %v2055
      %v2057 = vrot.slane %v195, 5
      %v2058 = vsel %vm2017, %v2055, %v2057
      %v2059 = vrot.slane %v196, 5
      %v2060 = vsel %vm2017, %v2057, %v2059
      %v2061 = vrot.slane %v197, 5
      %v2062 = vsel %vm2017, %v2059, %v2061
      %v2063 = vrot.slane %v198, 5
      %v2064 = vsel %vm2017, %v2061, %v2063
      %v2065 = vrot.slane %v199, 5
      %v2066 = vsel %vm2017, %v2063, %v2065
      %v2067 = vrot.slane %v200, 5
      %v2068 = vsel %vm2017, %v2065, %v2067
      %v2069 = vrot.slane %v201, 5
      %v2070 = vsel %vm2017, %v2067, %v2069
      %v2071 = vrot.slane %v202, 5
      %v2072 = vsel %vm2017, %v2069, %v2071
      %v2073 = vrot.slane %v203, 5
      %v2074 = vsel %vm2017, %v2071, %v2073
      %v2075 = vrot.slane %v204, 5
      %v2076 = vsel %vm2017, %v2073, %v2075
      %v2077 = vrot.slane %v205, 5
      %v2078 = vsel %vm2017, %v2075, %v2077
      %v2079 = vrot.slane %v206, 5
      %v2080 = vsel %vm2017, %v2077, %v2079
      %v2081 = vrot.slane %v207, 5
      %v2082 = vsel %vm2017, %v2079, %v2081
      %v2083 = vrot.slane %v208, 5
      %v2084 = vsel %vm2017, %v2081, %v2083
      %v2085 = vrot.slane %v209, 5
      %v2086 = vsel %vm2017, %v2083, %v2085
      %v2087 = vrot.slane %v210, 5
      %v2088 = vsel %vm2017, %v2085, %v2087
      %v2089 = vrot.slane %v211, 5
      %v2090 = vsel %vm2017, %v2087, %v2089
      %v2091 = vsel %vm326, %v2020, 0
      %v2093 = vsel %vm326, %v2022, 0
      %v2095 = vsel %vm326, %v2024, 0
      %v2097 = vsel %vm326, %v2026, 0
      %v2099 = vsel %vm326, %v2028, 0
      %v2101 = vsel %vm326, %v2030, 0
      %v2103 = vsel %vm326, %v2032, 0
      %v2105 = vsel %vm326, %v2034, 0
      %v2107 = vsel %vm326, %v2036, 0
      %v2109 = vsel %vm326, %v2038, 0
      %v2111 = vsel %vm326, %v2040, 0
      %v2113 = vsel %vm326, %v2042, 0
      %v2115 = vsel %vm326, %v2044, 0
      %v2117 = vsel %vm326, %v2046, 0
      %v2119 = vsel %vm326, %v2048, 0
      %v2121 = vsel %vm326, %v2050, 0
      %v2123 = vsel %vm326, %v2052, 0
      %v2125 = vsel %vm326, %v2054, 0
      %v2127 = vsel %vm326, %v2056, 0
      %v2129 = vsel %vm326, %v2058, 0
      %v2131 = vsel %vm326, %v2060, 0
      %v2133 = vsel %vm326, %v2062, 0
      %v2135 = vsel %vm326, %v2064, 0
      %v2137 = vsel %vm326, %v2066, 0
      %v2139 = vsel %vm326, %v2068, 0
      %v2141 = vsel %vm326, %v2070, 0
      %v2143 = vsel %vm326, %v2072, 0
      %v2145 = vsel %vm326, %v2074, 0
      %v2147 = vsel %vm326, %v2076, 0
      %v2149 = vsel %vm326, %v2078, 0
      %v2151 = vsel %vm326, %v2080, 0
      %v2153 = vsel %vm326, %v2082, 0
      %v2155 = vsel %vm326, %v2084, 0
      %v2157 = vsel %vm326, %v2086, 0
      %v2159 = vsel %vm326, %v2088, 0
      %v2161 = vsel %vm326, %v2090, 0
      %v2164 = vsel %vm399, %v2016, 0
      %2166 = vmatpush.msra.mxu0 0.0
      %2167 = vmatpush.msra.mxu0 0.0
      %2168 = vmatpush.msra.mxu0 0.0
      %2169 = vmatpush.msra.mxu0 0.0
      %2170 = vmatpush.msra.mxu0 0.0
      %2171 = vmatpush.msra.mxu0 0.0
      %2172 = vmatpush.msra.mxu0 0.0
      %2173 = vmatpush.msra.mxu0 0.0
      %2174 = vmatpush.msra.mxu0 0.0
      %2175 = vmatpush.msra.mxu0 0.0
      %2176 = vmatpush.msra.mxu0 0.0
      %2177 = vmatpush.msra.mxu0 0.0
      %2178 = vmatpush.msra.mxu0 0.0
      %2179 = vmatpush.msra.mxu0 0.0
      %2180 = vmatpush.msra.mxu0 0.0
      %2181 = vmatpush.msra.mxu0 %v2164
      %2182 = vmatmul.f32.gmra.mxu0 %v2091
      %v2183 = vpop.f32.mrf.mxu0
      %v2184 = vadd.f32 0.0, %v2183
      %2185 = vmatmul.f32.gmra.mxu0 %v2093
      %v2186 = vpop.f32.mrf.mxu0
      %v2187 = vadd.f32 0.0, %v2186
      %2188 = vmatmul.f32.gmra.mxu0 %v2095
      %v2189 = vpop.f32.mrf.mxu0
      %v2190 = vadd.f32 0.0, %v2189
      %2191 = vmatmul.f32.gmra.mxu0 %v2097
      %v2192 = vpop.f32.mrf.mxu0
      %v2193 = vadd.f32 0.0, %v2192
      %2194 = vmatmul.f32.gmra.mxu0 %v2099
      %v2195 = vpop.f32.mrf.mxu0
      %v2196 = vadd.f32 0.0, %v2195
      %2197 = vmatmul.f32.gmra.mxu0 %v2101
      %v2198 = vpop.f32.mrf.mxu0
      %v2199 = vadd.f32 0.0, %v2198
      %2200 = vmatmul.f32.gmra.mxu0 %v2103
      %v2201 = vpop.f32.mrf.mxu0
      %v2202 = vadd.f32 0.0, %v2201
      %2203 = vmatmul.f32.gmra.mxu0 %v2105
      %v2204 = vpop.f32.mrf.mxu0
      %v2205 = vadd.f32 0.0, %v2204
      %2206 = vmatmul.f32.gmra.mxu0 %v2107
      %v2207 = vpop.f32.mrf.mxu0
      %v2208 = vadd.f32 0.0, %v2207
      %2209 = vmatmul.f32.gmra.mxu0 %v2109
      %v2210 = vpop.f32.mrf.mxu0
      %v2211 = vadd.f32 0.0, %v2210
      %2212 = vmatmul.f32.gmra.mxu0 %v2111
      %v2213 = vpop.f32.mrf.mxu0
      %v2214 = vadd.f32 0.0, %v2213
      %2215 = vmatmul.f32.gmra.mxu0 %v2113
      %v2216 = vpop.f32.mrf.mxu0
      %v2217 = vadd.f32 0.0, %v2216
      %2218 = vmatmul.f32.gmra.mxu0 %v2115
      %v2219 = vpop.f32.mrf.mxu0
      %v2220 = vadd.f32 0.0, %v2219
      %2221 = vmatmul.f32.gmra.mxu0 %v2117
      %v2222 = vpop.f32.mrf.mxu0
      %v2223 = vadd.f32 0.0, %v2222
      %2224 = vmatmul.f32.gmra.mxu0 %v2119
      %v2225 = vpop.f32.mrf.mxu0
      %v2226 = vadd.f32 0.0, %v2225
      %2227 = vmatmul.f32.gmra.mxu0 %v2121
      %v2228 = vpop.f32.mrf.mxu0
      %v2229 = vadd.f32 0.0, %v2228
      %2230 = vmatmul.f32.gmra.mxu0 %v2123
      %v2231 = vpop.f32.mrf.mxu0
      %v2232 = vadd.f32 0.0, %v2231
      %2233 = vmatmul.f32.gmra.mxu0 %v2125
      %v2234 = vpop.f32.mrf.mxu0
      %v2235 = vadd.f32 0.0, %v2234
      %2236 = vmatmul.f32.gmra.mxu0 %v2127
      %v2237 = vpop.f32.mrf.mxu0
      %v2238 = vadd.f32 0.0, %v2237
      %2239 = vmatmul.f32.gmra.mxu0 %v2129
      %v2240 = vpop.f32.mrf.mxu0
      %v2241 = vadd.f32 0.0, %v2240
      %2242 = vmatmul.f32.gmra.mxu0 %v2131
      %v2243 = vpop.f32.mrf.mxu0
      %v2244 = vadd.f32 0.0, %v2243
      %2245 = vmatmul.f32.gmra.mxu0 %v2133
      %v2246 = vpop.f32.mrf.mxu0
      %v2247 = vadd.f32 0.0, %v2246
      %2248 = vmatmul.f32.gmra.mxu0 %v2135
      %v2249 = vpop.f32.mrf.mxu0
      %v2250 = vadd.f32 0.0, %v2249
      %2251 = vmatmul.f32.gmra.mxu0 %v2137
      %v2252 = vpop.f32.mrf.mxu0
      %v2253 = vadd.f32 0.0, %v2252
      %2254 = vmatmul.f32.gmra.mxu0 %v2139
      %v2255 = vpop.f32.mrf.mxu0
      %v2256 = vadd.f32 0.0, %v2255
      %2257 = vmatmul.f32.gmra.mxu0 %v2141
      %v2258 = vpop.f32.mrf.mxu0
      %v2259 = vadd.f32 0.0, %v2258
      %2260 = vmatmul.f32.gmra.mxu0 %v2143
      %v2261 = vpop.f32.mrf.mxu0
      %v2262 = vadd.f32 0.0, %v2261
      %2263 = vmatmul.f32.gmra.mxu0 %v2145
      %v2264 = vpop.f32.mrf.mxu0
      %v2265 = vadd.f32 0.0, %v2264
      %2266 = vmatmul.f32.gmra.mxu0 %v2147
      %v2267 = vpop.f32.mrf.mxu0
      %v2268 = vadd.f32 0.0, %v2267
      %2269 = vmatmul.f32.gmra.mxu0 %v2149
      %v2270 = vpop.f32.mrf.mxu0
      %v2271 = vadd.f32 0.0, %v2270
      %2272 = vmatmul.f32.gmra.mxu0 %v2151
      %v2273 = vpop.f32.mrf.mxu0
      %v2274 = vadd.f32 0.0, %v2273
      %2275 = vmatmul.f32.gmra.mxu0 %v2153
      %v2276 = vpop.f32.mrf.mxu0
      %v2277 = vadd.f32 0.0, %v2276
      %2278 = vmatmul.f32.gmra.mxu0 %v2155
      %v2279 = vpop.f32.mrf.mxu0
      %v2280 = vadd.f32 0.0, %v2279
      %2281 = vmatmul.f32.gmra.mxu0 %v2157
      %v2282 = vpop.f32.mrf.mxu0
      %v2283 = vadd.f32 0.0, %v2282
      %2284 = vmatmul.f32.gmra.mxu0 %v2159
      %v2285 = vpop.f32.mrf.mxu0
      %v2286 = vadd.f32 0.0, %v2285
      %2287 = vmatmul.f32.gmra.mxu0 %v2161
      %v2288 = vpop.f32.mrf.mxu0
      %v2289 = vadd.f32 0.0, %v2288
      %2290 = vdwg.mxu0
      %v2291 = vadd.f32 %v1979, %v2184
      %v2292 = vadd.f32 %v1980, %v2187
      %v2293 = vadd.f32 %v1981, %v2190
      %v2294 = vadd.f32 %v1982, %v2193
      %v2295 = vadd.f32 %v1983, %v2196
      %v2296 = vadd.f32 %v1984, %v2199
      %v2297 = vadd.f32 %v1985, %v2202
      %v2298 = vadd.f32 %v1986, %v2205
      %v2299 = vadd.f32 %v1987, %v2208
      %v2300 = vadd.f32 %v1988, %v2211
      %v2301 = vadd.f32 %v1989, %v2214
      %v2302 = vadd.f32 %v1990, %v2217
      %v2303 = vadd.f32 %v1991, %v2220
      %v2304 = vadd.f32 %v1992, %v2223
      %v2305 = vadd.f32 %v1993, %v2226
      %v2306 = vadd.f32 %v1994, %v2229
      %v2307 = vadd.f32 %v1995, %v2232
      %v2308 = vadd.f32 %v1996, %v2235
      %v2309 = vadd.f32 %v1997, %v2238
      %v2310 = vadd.f32 %v1998, %v2241
      %v2311 = vadd.f32 %v1999, %v2244
      %v2312 = vadd.f32 %v2000, %v2247
      %v2313 = vadd.f32 %v2001, %v2250
      %v2314 = vadd.f32 %v2002, %v2253
      %v2315 = vadd.f32 %v2003, %v2256
      %v2316 = vadd.f32 %v2004, %v2259
      %v2317 = vadd.f32 %v2005, %v2262
      %v2318 = vadd.f32 %v2006, %v2265
      %v2319 = vadd.f32 %v2007, %v2268
      %v2320 = vadd.f32 %v2008, %v2271
      %v2321 = vadd.f32 %v2009, %v2274
      %v2322 = vadd.f32 %v2010, %v2277
      %v2323 = vadd.f32 %v2011, %v2280
      %v2324 = vadd.f32 %v2012, %v2283
      %v2325 = vadd.f32 %v2013, %v2286
      %v2326 = vadd.f32 %v2014, %v2289
      %s2327 = scalar_lea.vmem %s1, 32
      %v2328 = vld [vmem:[%s2327] sm:$0xf]
      %vm2329 = vcmask 1041408
      %v2330 = vrot.slane %v175, 6
      %v2331 = vrot.slane %v176, 6
      %v2332 = vsel %vm2329, %v2330, %v2331
      %v2333 = vrot.slane %v177, 6
      %v2334 = vsel %vm2329, %v2331, %v2333
      %v2335 = vrot.slane %v178, 6
      %v2336 = vsel %vm2329, %v2333, %v2335
      %v2337 = vrot.slane %v179, 6
      %v2338 = vsel %vm2329, %v2335, %v2337
      %v2339 = vrot.slane %v180, 6
      %v2340 = vsel %vm2329, %v2337, %v2339
      %v2341 = vrot.slane %v181, 6
      %v2342 = vsel %vm2329, %v2339, %v2341
      %v2343 = vrot.slane %v182, 6
      %v2344 = vsel %vm2329, %v2341, %v2343
      %v2345 = vrot.slane %v183, 6
      %v2346 = vsel %vm2329, %v2343, %v2345
      %v2347 = vrot.slane %v184, 6
      %v2348 = vsel %vm2329, %v2345, %v2347
      %v2349 = vrot.slane %v185, 6
      %v2350 = vsel %vm2329, %v2347, %v2349
      %v2351 = vrot.slane %v186, 6
      %v2352 = vsel %vm2329, %v2349, %v2351
      %v2353 = vrot.slane %v187, 6
      %v2354 = vsel %vm2329, %v2351, %v2353
      %v2355 = vrot.slane %v188, 6
      %v2356 = vsel %vm2329, %v2353, %v2355
      %v2357 = vrot.slane %v189, 6
      %v2358 = vsel %vm2329, %v2355, %v2357
      %v2359 = vrot.slane %v190, 6
      %v2360 = vsel %vm2329, %v2357, %v2359
      %v2361 = vrot.slane %v191, 6
      %v2362 = vsel %vm2329, %v2359, %v2361
      %v2363 = vrot.slane %v192, 6
      %v2364 = vsel %vm2329, %v2361, %v2363
      %v2365 = vrot.slane %v193, 6
      %v2366 = vsel %vm2329, %v2363, %v2365
      %v2367 = vrot.slane %v194, 6
      %v2368 = vsel %vm2329, %v2365, %v2367
      %v2369 = vrot.slane %v195, 6
      %v2370 = vsel %vm2329, %v2367, %v2369
      %v2371 = vrot.slane %v196, 6
      %v2372 = vsel %vm2329, %v2369, %v2371
      %v2373 = vrot.slane %v197, 6
      %v2374 = vsel %vm2329, %v2371, %v2373
      %v2375 = vrot.slane %v198, 6
      %v2376 = vsel %vm2329, %v2373, %v2375
      %v2377 = vrot.slane %v199, 6
      %v2378 = vsel %vm2329, %v2375, %v2377
      %v2379 = vrot.slane %v200, 6
      %v2380 = vsel %vm2329, %v2377, %v2379
      %v2381 = vrot.slane %v201, 6
      %v2382 = vsel %vm2329, %v2379, %v2381
      %v2383 = vrot.slane %v202, 6
      %v2384 = vsel %vm2329, %v2381, %v2383
      %v2385 = vrot.slane %v203, 6
      %v2386 = vsel %vm2329, %v2383, %v2385
      %v2387 = vrot.slane %v204, 6
      %v2388 = vsel %vm2329, %v2385, %v2387
      %v2389 = vrot.slane %v205, 6
      %v2390 = vsel %vm2329, %v2387, %v2389
      %v2391 = vrot.slane %v206, 6
      %v2392 = vsel %vm2329, %v2389, %v2391
      %v2393 = vrot.slane %v207, 6
      %v2394 = vsel %vm2329, %v2391, %v2393
      %v2395 = vrot.slane %v208, 6
      %v2396 = vsel %vm2329, %v2393, %v2395
      %v2397 = vrot.slane %v209, 6
      %v2398 = vsel %vm2329, %v2395, %v2397
      %v2399 = vrot.slane %v210, 6
      %v2400 = vsel %vm2329, %v2397, %v2399
      %v2401 = vrot.slane %v211, 6
      %v2402 = vsel %vm2329, %v2399, %v2401
      %v2403 = vsel %vm326, %v2332, 0
      %v2405 = vsel %vm326, %v2334, 0
      %v2407 = vsel %vm326, %v2336, 0
      %v2409 = vsel %vm326, %v2338, 0
      %v2411 = vsel %vm326, %v2340, 0
      %v2413 = vsel %vm326, %v2342, 0
      %v2415 = vsel %vm326, %v2344, 0
      %v2417 = vsel %vm326, %v2346, 0
      %v2419 = vsel %vm326, %v2348, 0
      %v2421 = vsel %vm326, %v2350, 0
      %v2423 = vsel %vm326, %v2352, 0
      %v2425 = vsel %vm326, %v2354, 0
      %v2427 = vsel %vm326, %v2356, 0
      %v2429 = vsel %vm326, %v2358, 0
      %v2431 = vsel %vm326, %v2360, 0
      %v2433 = vsel %vm326, %v2362, 0
      %v2435 = vsel %vm326, %v2364, 0
      %v2437 = vsel %vm326, %v2366, 0
      %v2439 = vsel %vm326, %v2368, 0
      %v2441 = vsel %vm326, %v2370, 0
      %v2443 = vsel %vm326, %v2372, 0
      %v2445 = vsel %vm326, %v2374, 0
      %v2447 = vsel %vm326, %v2376, 0
      %v2449 = vsel %vm326, %v2378, 0
      %v2451 = vsel %vm326, %v2380, 0
      %v2453 = vsel %vm326, %v2382, 0
      %v2455 = vsel %vm326, %v2384, 0
      %v2457 = vsel %vm326, %v2386, 0
      %v2459 = vsel %vm326, %v2388, 0
      %v2461 = vsel %vm326, %v2390, 0
      %v2463 = vsel %vm326, %v2392, 0
      %v2465 = vsel %vm326, %v2394, 0
      %v2467 = vsel %vm326, %v2396, 0
      %v2469 = vsel %vm326, %v2398, 0
      %v2471 = vsel %vm326, %v2400, 0
      %v2473 = vsel %vm326, %v2402, 0
      %v2476 = vsel %vm399, %v2328, 0
      %2478 = vmatpush.msra.mxu0 0.0
      %2479 = vmatpush.msra.mxu0 0.0
      %2480 = vmatpush.msra.mxu0 0.0
      %2481 = vmatpush.msra.mxu0 0.0
      %2482 = vmatpush.msra.mxu0 0.0
      %2483 = vmatpush.msra.mxu0 0.0
      %2484 = vmatpush.msra.mxu0 0.0
      %2485 = vmatpush.msra.mxu0 0.0
      %2486 = vmatpush.msra.mxu0 0.0
      %2487 = vmatpush.msra.mxu0 0.0
      %2488 = vmatpush.msra.mxu0 0.0
      %2489 = vmatpush.msra.mxu0 0.0
      %2490 = vmatpush.msra.mxu0 0.0
      %2491 = vmatpush.msra.mxu0 0.0
      %2492 = vmatpush.msra.mxu0 0.0
      %2493 = vmatpush.msra.mxu0 %v2476
      %2494 = vmatmul.f32.gmra.mxu0 %v2403
      %v2495 = vpop.f32.mrf.mxu0
      %v2496 = vadd.f32 0.0, %v2495
      %2497 = vmatmul.f32.gmra.mxu0 %v2405
      %v2498 = vpop.f32.mrf.mxu0
      %v2499 = vadd.f32 0.0, %v2498
      %2500 = vmatmul.f32.gmra.mxu0 %v2407
      %v2501 = vpop.f32.mrf.mxu0
      %v2502 = vadd.f32 0.0, %v2501
      %2503 = vmatmul.f32.gmra.mxu0 %v2409
      %v2504 = vpop.f32.mrf.mxu0
      %v2505 = vadd.f32 0.0, %v2504
      %2506 = vmatmul.f32.gmra.mxu0 %v2411
      %v2507 = vpop.f32.mrf.mxu0
      %v2508 = vadd.f32 0.0, %v2507
      %2509 = vmatmul.f32.gmra.mxu0 %v2413
      %v2510 = vpop.f32.mrf.mxu0
      %v2511 = vadd.f32 0.0, %v2510
      %2512 = vmatmul.f32.gmra.mxu0 %v2415
      %v2513 = vpop.f32.mrf.mxu0
      %v2514 = vadd.f32 0.0, %v2513
      %2515 = vmatmul.f32.gmra.mxu0 %v2417
      %v2516 = vpop.f32.mrf.mxu0
      %v2517 = vadd.f32 0.0, %v2516
      %2518 = vmatmul.f32.gmra.mxu0 %v2419
      %v2519 = vpop.f32.mrf.mxu0
      %v2520 = vadd.f32 0.0, %v2519
      %2521 = vmatmul.f32.gmra.mxu0 %v2421
      %v2522 = vpop.f32.mrf.mxu0
      %v2523 = vadd.f32 0.0, %v2522
      %2524 = vmatmul.f32.gmra.mxu0 %v2423
      %v2525 = vpop.f32.mrf.mxu0
      %v2526 = vadd.f32 0.0, %v2525
      %2527 = vmatmul.f32.gmra.mxu0 %v2425
      %v2528 = vpop.f32.mrf.mxu0
      %v2529 = vadd.f32 0.0, %v2528
      %2530 = vmatmul.f32.gmra.mxu0 %v2427
      %v2531 = vpop.f32.mrf.mxu0
      %v2532 = vadd.f32 0.0, %v2531
      %2533 = vmatmul.f32.gmra.mxu0 %v2429
      %v2534 = vpop.f32.mrf.mxu0
      %v2535 = vadd.f32 0.0, %v2534
      %2536 = vmatmul.f32.gmra.mxu0 %v2431
      %v2537 = vpop.f32.mrf.mxu0
      %v2538 = vadd.f32 0.0, %v2537
      %2539 = vmatmul.f32.gmra.mxu0 %v2433
      %v2540 = vpop.f32.mrf.mxu0
      %v2541 = vadd.f32 0.0, %v2540
      %2542 = vmatmul.f32.gmra.mxu0 %v2435
      %v2543 = vpop.f32.mrf.mxu0
      %v2544 = vadd.f32 0.0, %v2543
      %2545 = vmatmul.f32.gmra.mxu0 %v2437
      %v2546 = vpop.f32.mrf.mxu0
      %v2547 = vadd.f32 0.0, %v2546
      %2548 = vmatmul.f32.gmra.mxu0 %v2439
      %v2549 = vpop.f32.mrf.mxu0
      %v2550 = vadd.f32 0.0, %v2549
      %2551 = vmatmul.f32.gmra.mxu0 %v2441
      %v2552 = vpop.f32.mrf.mxu0
      %v2553 = vadd.f32 0.0, %v2552
      %2554 = vmatmul.f32.gmra.mxu0 %v2443
      %v2555 = vpop.f32.mrf.mxu0
      %v2556 = vadd.f32 0.0, %v2555
      %2557 = vmatmul.f32.gmra.mxu0 %v2445
      %v2558 = vpop.f32.mrf.mxu0
      %v2559 = vadd.f32 0.0, %v2558
      %2560 = vmatmul.f32.gmra.mxu0 %v2447
      %v2561 = vpop.f32.mrf.mxu0
      %v2562 = vadd.f32 0.0, %v2561
      %2563 = vmatmul.f32.gmra.mxu0 %v2449
      %v2564 = vpop.f32.mrf.mxu0
      %v2565 = vadd.f32 0.0, %v2564
      %2566 = vmatmul.f32.gmra.mxu0 %v2451
      %v2567 = vpop.f32.mrf.mxu0
      %v2568 = vadd.f32 0.0, %v2567
      %2569 = vmatmul.f32.gmra.mxu0 %v2453
      %v2570 = vpop.f32.mrf.mxu0
      %v2571 = vadd.f32 0.0, %v2570
      %2572 = vmatmul.f32.gmra.mxu0 %v2455
      %v2573 = vpop.f32.mrf.mxu0
      %v2574 = vadd.f32 0.0, %v2573
      %2575 = vmatmul.f32.gmra.mxu0 %v2457
      %v2576 = vpop.f32.mrf.mxu0
      %v2577 = vadd.f32 0.0, %v2576
      %2578 = vmatmul.f32.gmra.mxu0 %v2459
      %v2579 = vpop.f32.mrf.mxu0
      %v2580 = vadd.f32 0.0, %v2579
      %2581 = vmatmul.f32.gmra.mxu0 %v2461
      %v2582 = vpop.f32.mrf.mxu0
      %v2583 = vadd.f32 0.0, %v2582
      %2584 = vmatmul.f32.gmra.mxu0 %v2463
      %v2585 = vpop.f32.mrf.mxu0
      %v2586 = vadd.f32 0.0, %v2585
      %2587 = vmatmul.f32.gmra.mxu0 %v2465
      %v2588 = vpop.f32.mrf.mxu0
      %v2589 = vadd.f32 0.0, %v2588
      %2590 = vmatmul.f32.gmra.mxu0 %v2467
      %v2591 = vpop.f32.mrf.mxu0
      %v2592 = vadd.f32 0.0, %v2591
      %2593 = vmatmul.f32.gmra.mxu0 %v2469
      %v2594 = vpop.f32.mrf.mxu0
      %v2595 = vadd.f32 0.0, %v2594
      %2596 = vmatmul.f32.gmra.mxu0 %v2471
      %v2597 = vpop.f32.mrf.mxu0
      %v2598 = vadd.f32 0.0, %v2597
      %2599 = vmatmul.f32.gmra.mxu0 %v2473
      %v2600 = vpop.f32.mrf.mxu0
      %v2601 = vadd.f32 0.0, %v2600
      %2602 = vdwg.mxu0
      %v2603 = vadd.f32 %v2291, %v2496
      %v2604 = vadd.f32 %v2292, %v2499
      %v2605 = vadd.f32 %v2293, %v2502
      %v2606 = vadd.f32 %v2294, %v2505
      %v2607 = vadd.f32 %v2295, %v2508
      %v2608 = vadd.f32 %v2296, %v2511
      %v2609 = vadd.f32 %v2297, %v2514
      %v2610 = vadd.f32 %v2298, %v2517
      %v2611 = vadd.f32 %v2299, %v2520
      %v2612 = vadd.f32 %v2300, %v2523
      %v2613 = vadd.f32 %v2301, %v2526
      %v2614 = vadd.f32 %v2302, %v2529
      %v2615 = vadd.f32 %v2303, %v2532
      %v2616 = vadd.f32 %v2304, %v2535
      %v2617 = vadd.f32 %v2305, %v2538
      %v2618 = vadd.f32 %v2306, %v2541
      %v2619 = vadd.f32 %v2307, %v2544
      %v2620 = vadd.f32 %v2308, %v2547
      %v2621 = vadd.f32 %v2309, %v2550
      %v2622 = vadd.f32 %v2310, %v2553
      %v2623 = vadd.f32 %v2311, %v2556
      %v2624 = vadd.f32 %v2312, %v2559
      %v2625 = vadd.f32 %v2313, %v2562
      %v2626 = vadd.f32 %v2314, %v2565
      %v2627 = vadd.f32 %v2315, %v2568
      %v2628 = vadd.f32 %v2316, %v2571
      %v2629 = vadd.f32 %v2317, %v2574
      %v2630 = vadd.f32 %v2318, %v2577
      %v2631 = vadd.f32 %v2319, %v2580
      %v2632 = vadd.f32 %v2320, %v2583
      %v2633 = vadd.f32 %v2321, %v2586
      %v2634 = vadd.f32 %v2322, %v2589
      %v2635 = vadd.f32 %v2323, %v2592
      %v2636 = vadd.f32 %v2324, %v2595
      %v2637 = vadd.f32 %v2325, %v2598
      %v2638 = vadd.f32 %v2326, %v2601
      %v2639 = vld [vmem:[%s2] sm:$0x1]
      %v2641 = vperm.slane %v2639, 0
      %v2643 = vadd.f32 %v2603, %v2641
      %v2644 = vadd.f32 %v2604, %v2641
      %v2645 = vadd.f32 %v2605, %v2641
      %v2646 = vadd.f32 %v2606, %v2641
      %v2647 = vadd.f32 %v2607, %v2641
      %v2648 = vadd.f32 %v2608, %v2641
      %v2649 = vadd.f32 %v2609, %v2641
      %v2650 = vadd.f32 %v2610, %v2641
      %v2651 = vadd.f32 %v2611, %v2641
      %v2652 = vadd.f32 %v2612, %v2641
      %v2653 = vadd.f32 %v2613, %v2641
      %v2654 = vadd.f32 %v2614, %v2641
      %v2655 = vadd.f32 %v2615, %v2641
      %v2656 = vadd.f32 %v2616, %v2641
      %v2657 = vadd.f32 %v2617, %v2641
      %v2658 = vadd.f32 %v2618, %v2641
      %v2659 = vadd.f32 %v2619, %v2641
      %v2660 = vadd.f32 %v2620, %v2641
      %v2661 = vadd.f32 %v2621, %v2641
      %v2662 = vadd.f32 %v2622, %v2641
      %v2663 = vadd.f32 %v2623, %v2641
      %v2664 = vadd.f32 %v2624, %v2641
      %v2665 = vadd.f32 %v2625, %v2641
      %v2666 = vadd.f32 %v2626, %v2641
      %v2667 = vadd.f32 %v2627, %v2641
      %v2668 = vadd.f32 %v2628, %v2641
      %v2669 = vadd.f32 %v2629, %v2641
      %v2670 = vadd.f32 %v2630, %v2641
      %v2671 = vadd.f32 %v2631, %v2641
      %v2672 = vadd.f32 %v2632, %v2641
      %v2673 = vadd.f32 %v2633, %v2641
      %v2674 = vadd.f32 %v2634, %v2641
      %v2675 = vadd.f32 %v2635, %v2641
      %v2676 = vadd.f32 %v2636, %v2641
      %v2677 = vadd.f32 %v2637, %v2641
      %v2678 = vadd.f32 %v2638, %v2641
      %v2679 = vmul.f32 %v2643, 0.2
      %v2680 = vmul.f32 %v2644, 0.2
      %v2681 = vmul.f32 %v2645, 0.2
      %v2682 = vmul.f32 %v2646, 0.2
      %v2683 = vmul.f32 %v2647, 0.2
      %v2684 = vmul.f32 %v2648, 0.2
      %v2685 = vmul.f32 %v2649, 0.2
      %v2686 = vmul.f32 %v2650, 0.2
      %v2687 = vmul.f32 %v2651, 0.2
      %v2688 = vmul.f32 %v2652, 0.2
      %v2689 = vmul.f32 %v2653, 0.2
      %v2690 = vmul.f32 %v2654, 0.2
      %v2691 = vmul.f32 %v2655, 0.2
      %v2692 = vmul.f32 %v2656, 0.2
      %v2693 = vmul.f32 %v2657, 0.2
      %v2694 = vmul.f32 %v2658, 0.2
      %v2695 = vmul.f32 %v2659, 0.2
      %v2696 = vmul.f32 %v2660, 0.2
      %v2697 = vmul.f32 %v2661, 0.2
      %v2698 = vmul.f32 %v2662, 0.2
      %v2699 = vmul.f32 %v2663, 0.2
      %v2700 = vmul.f32 %v2664, 0.2
      %v2701 = vmul.f32 %v2665, 0.2
      %v2702 = vmul.f32 %v2666, 0.2
      %v2703 = vmul.f32 %v2667, 0.2
      %v2704 = vmul.f32 %v2668, 0.2
      %v2705 = vmul.f32 %v2669, 0.2
      %v2706 = vmul.f32 %v2670, 0.2
      %v2707 = vmul.f32 %v2671, 0.2
      %v2708 = vmul.f32 %v2672, 0.2
      %v2709 = vmul.f32 %v2673, 0.2
      %v2710 = vmul.f32 %v2674, 0.2
      %v2711 = vmul.f32 %v2675, 0.2
      %v2712 = vmul.f32 %v2676, 0.2
      %v2713 = vmul.f32 %v2677, 0.2
      %v2714 = vmul.f32 %v2678, 0.2
      %v2715 = vmax.f32 %v2643, %v2679
      %v2716 = vmax.f32 %v2644, %v2680
      %v2717 = vmax.f32 %v2645, %v2681
      %v2718 = vmax.f32 %v2646, %v2682
      %v2719 = vmax.f32 %v2647, %v2683
      %v2720 = vmax.f32 %v2648, %v2684
      %v2721 = vmax.f32 %v2649, %v2685
      %v2722 = vmax.f32 %v2650, %v2686
      %v2723 = vmax.f32 %v2651, %v2687
      %v2724 = vmax.f32 %v2652, %v2688
      %v2725 = vmax.f32 %v2653, %v2689
      %v2726 = vmax.f32 %v2654, %v2690
      %v2727 = vmax.f32 %v2655, %v2691
      %v2728 = vmax.f32 %v2656, %v2692
      %v2729 = vmax.f32 %v2657, %v2693
      %v2730 = vmax.f32 %v2658, %v2694
      %v2731 = vmax.f32 %v2659, %v2695
      %v2732 = vmax.f32 %v2660, %v2696
      %v2733 = vmax.f32 %v2661, %v2697
      %v2734 = vmax.f32 %v2662, %v2698
      %v2735 = vmax.f32 %v2663, %v2699
      %v2736 = vmax.f32 %v2664, %v2700
      %v2737 = vmax.f32 %v2665, %v2701
      %v2738 = vmax.f32 %v2666, %v2702
      %v2739 = vmax.f32 %v2667, %v2703
      %v2740 = vmax.f32 %v2668, %v2704
      %v2741 = vmax.f32 %v2669, %v2705
      %v2742 = vmax.f32 %v2670, %v2706
      %v2743 = vmax.f32 %v2671, %v2707
      %v2744 = vmax.f32 %v2672, %v2708
      %v2745 = vmax.f32 %v2673, %v2709
      %v2746 = vmax.f32 %v2674, %v2710
      %v2747 = vmax.f32 %v2675, %v2711
      %v2748 = vmax.f32 %v2676, %v2712
      %v2749 = vmax.f32 %v2677, %v2713
      %v2750 = vmax.f32 %v2678, %v2714
      %vm2751 = vcmask 64512
      %2752 = vst.msk [vmem:[%s170] sm:$0xff] %vm2751, %v2715
      %2753 = vst.msk [vmem:[%s170 + $0x8] sm:$0xff] %vm2751, %v2716
      %2754 = vst.msk [vmem:[%s170 + $0x10] sm:$0xff] %vm2751, %v2717
      %2755 = vst.msk [vmem:[%s170 + $0x18] sm:$0xff] %vm2751, %v2718
      %2756 = vst.msk [vmem:[%s170 + $0x20] sm:$0xff] %vm2751, %v2719
      %2757 = vst.msk [vmem:[%s170 + $0x28] sm:$0xff] %vm2751, %v2720
      %2758 = vst.msk [vmem:[%s170 + $0x30] sm:$0xff] %vm2751, %v2721
      %2759 = vst.msk [vmem:[%s170 + $0x38] sm:$0xff] %vm2751, %v2722
      %2760 = vst.msk [vmem:[%s170 + $0x40] sm:$0xff] %vm2751, %v2723
      %2761 = vst.msk [vmem:[%s170 + $0x48] sm:$0xff] %vm2751, %v2724
      %2762 = vst.msk [vmem:[%s170 + $0x50] sm:$0xff] %vm2751, %v2725
      %2763 = vst.msk [vmem:[%s170 + $0x58] sm:$0xff] %vm2751, %v2726
      %2764 = vst.msk [vmem:[%s170 + $0x60] sm:$0xff] %vm2751, %v2727
      %2765 = vst.msk [vmem:[%s170 + $0x68] sm:$0xff] %vm2751, %v2728
      %2766 = vst.msk [vmem:[%s170 + $0x70] sm:$0xff] %vm2751, %v2729
      %2767 = vst.msk [vmem:[%s170 + $0x78] sm:$0xff] %vm2751, %v2730
      %2768 = vst.msk [vmem:[%s170 + $0x80] sm:$0xff] %vm2751, %v2731
      %2769 = vst.msk [vmem:[%s170 + $0x88] sm:$0xff] %vm2751, %v2732
      %2770 = vst.msk [vmem:[%s170 + $0x90] sm:$0xff] %vm2751, %v2733
      %2771 = vst.msk [vmem:[%s170 + $0x98] sm:$0xff] %vm2751, %v2734
      %2772 = vst.msk [vmem:[%s170 + $0xa0] sm:$0xff] %vm2751, %v2735
      %2773 = vst.msk [vmem:[%s170 + $0xa8] sm:$0xff] %vm2751, %v2736
      %2774 = vst.msk [vmem:[%s170 + $0xb0] sm:$0xff] %vm2751, %v2737
      %2775 = vst.msk [vmem:[%s170 + $0xb8] sm:$0xff] %vm2751, %v2738
      %2776 = vst.msk [vmem:[%s170 + $0xc0] sm:$0xff] %vm2751, %v2739
      %2777 = vst.msk [vmem:[%s170 + $0xc8] sm:$0xff] %vm2751, %v2740
      %2778 = vst.msk [vmem:[%s170 + $0xd0] sm:$0xff] %vm2751, %v2741
      %2779 = vst.msk [vmem:[%s170 + $0xd8] sm:$0xff] %vm2751, %v2742
      %2780 = vst.msk [vmem:[%s170 + $0xe0] sm:$0xff] %vm2751, %v2743
      %2781 = vst.msk [vmem:[%s170 + $0xe8] sm:$0xff] %vm2751, %v2744
      %2782 = vst.msk [vmem:[%s170 + $0xf0] sm:$0xff] %vm2751, %v2745
      %2783 = vst.msk [vmem:[%s170 + $0xf8] sm:$0xff] %vm2751, %v2746
      %2784 = vst.msk [vmem:[%s170 + $0x100] sm:$0xff] %vm2751, %v2747
      %2785 = vst.msk [vmem:[%s170 + $0x108] sm:$0xff] %vm2751, %v2748
      %2786 = vst.msk [vmem:[%s170 + $0x110] sm:$0xff] %vm2751, %v2749
      %2787 = vst.msk [vmem:[%s170 + $0x118] sm:$0xff] %vm2751, %v2750
      %p2788 = scmp.lt.s32.totalorder %s14, 1
      %s2789 = scalar_select %p2788, %s14, 1
      %s2790 = smul.addr %s2789, 36
      %s2791 = smul.addr %s2790, 8
      %s2792 = scalar_lea.vmem %s3, %s2791
      // Predicated region
      $region33: #{conv_bn_leaky_relu2d.1} parent=31 // pred_check
        %p2793 = pneg %p100
      $region34: #{conv_bn_leaky_relu2d.1} parent=31 // pred_check_branch
        %2795 = sbr.rel (%p2793) target = $region36
      $region35: #{conv_bn_leaky_relu2d.1} parent=31 // pred_region
        _
      $region36: #{conv_bn_leaky_relu2d.1} parent=31 // pred_fallthru
        _
    $region32: #{conv_bn_leaky_relu2d.1} parent=5 // pred_fallthru
      _
    %p2796 = scmp.le.s32.totalorder 2, %s9
    // Predicated region
    $region37: #{conv_bn_leaky_relu2d.1} parent=5 // pred_check
      %p2797 = pneg %p2796
    $region38: #{conv_bn_leaky_relu2d.1} parent=5 // pred_check_branch
      %2799 = sbr.rel (%p2797) target = $region40
    $region39: #{conv_bn_leaky_relu2d.1} parent=5 // pred_region
      %s2800 = ssub.s32 %s9, 2
      // Predicated region
      $region41: #{conv_bn_leaky_relu2d.1} parent=39 // pred_check
        %p2801 = pneg %p106
      $region42: #{conv_bn_leaky_relu2d.1} parent=39 // pred_check_branch
        %2803 = sbr.rel (%p2801) target = $region44
      $region43: #{conv_bn_leaky_relu2d.1} parent=39 // pred_region
        %p2804 = scmp.lt.s32.totalorder %s15, 1
        %s2805 = scalar_select %p2804, %s15, 1
        %s2806 = smul.addr %s2805, 36
        %s2807 = smul.addr %s2806, 8
        %s2808 = scalar_lea.vmem %s3, %s2807
      $region44: #{conv_bn_leaky_relu2d.1} parent=39 // pred_fallthru
        _
    $region40: #{conv_bn_leaky_relu2d.1} parent=5 // pred_fallthru
      _
  $region6: #{conv_bn_leaky_relu2d.1} parent=0 // loop_footer
    %s13 = sadd.s32 1, %s9
  $region7: #{conv_bn_leaky_relu2d.1} parent=0 // loop_footer_branch
    %8 = sbr.rel target = $region3
  $region8: #{conv_bn_leaky_relu2d.1} parent=0 // loop_exit
    _

</llo_original>
